<compile_context>
chip_gen: v7x
topology: tpu7x:2x2x1
jax: 0.10.0
libtpu: 0.0.40
codegen_flags: <defaults>
</compile_context>

<pallas_src>
import functools

import jax
import jax.numpy as jnp
from jax.experimental import pallas as pl
from jax.experimental.pallas import tpu as pltpu


# ----------------------------- configuration -------------------------------
class ModelParams:
    acoustic_encoding_dim = 16
    semantic_encoding_dim = 8
    timing_encoding_dim = 8
    hidden_dim = 32


class Config:
    model_params = ModelParams


N_MELS = 40      # spectrogram feature dim (specs)
N_FEATS = 16     # linguistic/semantic feature dim (feats)
ENC_DIM = (ModelParams.acoustic_encoding_dim
           + ModelParams.semantic_encoding_dim
           + ModelParams.timing_encoding_dim)          # 32
HIDDEN = ModelParams.hidden_dim                        # 32
RAW_IN = N_MELS + N_FEATS + 1                          # 57 = [spec|feat|silence]
ENC_IN = 64                                            # zero-padded K for fused encoder


# ----------------------------- fused Pallas kernel --------------------------
def fused_forward_kernel(xcat_ref, tw_ref,
                         w_enc_ref, b_enc_ref,
                         w_ih_ref, b_gates_ref, w_hh_ref,
                         w_out_ref, b_out_ref,
                         loss_ref, hs_ref, *, batch, seq):
    """Encoder -> LSTM -> head -> masked BCE, fully fused (single invocation).

    xcat_ref : (seq*batch, ENC_IN)  time-major [spec | feat | silence | 0-pad]
    tw_ref   : (seq*batch, 2)       time-major [target, mask/len weight]
    loss_ref : (1, 1)               sum over utterances of per-utterance-mean BCE
    hs_ref   : (seq*batch, HIDDEN)  VMEM scratch holding every hidden state
    """
    H = HIDDEN

    # --- fused acoustic/semantic/timing encoders: one matmul + tanh --------
    emb = jnp.tanh(
        jnp.dot(xcat_ref[...], w_enc_ref[...],
                preferred_element_type=jnp.float32) + b_enc_ref[...])   # (T*B, ENC_DIM)

    # --- input->gate projections for ALL timesteps in one matmul -----------
    gates_x = (jnp.dot(emb, w_ih_ref[...],
                       preferred_element_type=jnp.float32)
               + b_gates_ref[...])                                      # (T*B, 4H)

    # --- unrolled recurrence; h/c are vreg-resident carries -----------------
    w_hh = w_hh_ref[...]
    h = jnp.zeros((batch, H), jnp.float32)
    c = jnp.zeros((batch, H), jnp.float32)
    for t in range(seq):                       # seq == 8: fully unrolled, static indices
        g = gates_x[t * batch:(t + 1) * batch, :] + jnp.dot(
            h, w_hh, preferred_element_type=jnp.float32)                # (B, 4H)
        # PyTorch gate order: i, f, g, o
        i_g = jax.nn.sigmoid(g[:, 0 * H:1 * H])
        f_g = jax.nn.sigmoid(g[:, 1 * H:2 * H])
        g_g = jnp.tanh(g[:, 2 * H:3 * H])
        o_g = jax.nn.sigmoid(g[:, 3 * H:4 * H])
        c = f_g * c + i_g * g_g
        h = o_g * jnp.tanh(c)
        hs_ref[t * batch:(t + 1) * batch, :] = h

    # --- batched Linear(H, 1) head + masked BCE-with-logits -----------------
    logits = (jnp.dot(hs_ref[...], w_out_ref[...],
                      preferred_element_type=jnp.float32) + b_out_ref[...])  # (T*B, 1)
    z = tw_ref[:, 0:1]                         # targets
    w = tw_ref[:, 1:2]                         # mask / length (per-utterance mean weight)
    per = (jnp.maximum(logits, 0.0) - logits * z
           + jnp.log(1.0 + jnp.exp(-jnp.abs(logits))))
    loss_ref[...] = jnp.sum(per * w).reshape(1, 1)


# ----------------------------- wrappers ------------------------------------
def _block_diag_encoder_weight(wa, ws, bt_wt):
    """Block-diagonal (RAW_IN, ENC_DIM) weight realising the three encoders."""
    A = wa.shape[1]        # 16
    S = ws.shape[1]        # 8
    Tm = bt_wt.shape[1]    # 8
    row_a = jnp.concatenate([wa, jnp.zeros((wa.shape[0], S + Tm), jnp.float32)], axis=1)
    row_s = jnp.concatenate([jnp.zeros((ws.shape[0], A), jnp.float32), ws,
                             jnp.zeros((ws.shape[0], Tm), jnp.float32)], axis=1)
    row_t = jnp.concatenate([jnp.zeros((bt_wt.shape[0], A + S), jnp.float32), bt_wt], axis=1)
    return jnp.concatenate([row_a, row_s, row_t], axis=0)   # (57, 32)


@functools.partial(jax.jit, static_argnames=("split",))
def baseline_system_forward(params, specs, feats, silence, targets,
                            input_lengths, split="train"):
    """Forward pass of BaselineSystem: returns {f'{split}_loss': scalar}."""
    B, T, _ = specs.shape

    # ---- tiny XLA-side prep (layout plumbing only; all compute is in-kernel) ----
    # Time-major [spec | feat | silence | 0-pad] input, (T*B, ENC_IN)
    xcat = jnp.concatenate(
        [specs, feats, silence, jnp.zeros((B, T, ENC_IN - RAW_IN), jnp.float32)], axis=-1)
    xcat = jnp.transpose(xcat, (1, 0, 2)).reshape(T * B, ENC_IN)

    # Fused encoder weights (block-diagonal) / bias (concat).
    w_enc = _block_diag_encoder_weight(params["wa"], params["ws"], params["wt"])
    w_enc = jnp.concatenate(
        [w_enc, jnp.zeros((ENC_IN - RAW_IN, ENC_DIM), jnp.float32)], axis=0)   # (64, 32)
    b_enc = jnp.concatenate([params["ba"], params["bs"], params["bt"]], axis=-1)  # (1, 32)

    # Targets + per-utterance-mean weights packed into one (T*B, 2) array.
    lens = jnp.maximum(input_lengths.astype(jnp.float32), 1.0)[:, None]   # guard len==0
    pos = jnp.arange(T, dtype=jnp.int32)[None, :]
    mask = (pos < input_lengths[:, None]).astype(jnp.float32)
    weight = mask / lens                                                  # (B, T)
    tw = jnp.stack([targets.astype(jnp.float32), weight], axis=-1)        # (B, T, 2)
    tw = jnp.transpose(tw, (1, 0, 2)).reshape(T * B, 2)                   # time-major

    loss = pl.pallas_call(
        functools.partial(fused_forward_kernel, batch=B, seq=T),
        out_shape=jax.ShapeDtypeStruct((1, 1), jnp.float32),
        scratch_shapes=[pltpu.VMEM((T * B, HIDDEN), jnp.float32)],
    )(xcat, tw, w_enc, b_enc,
      params["w_ih_t"], params["b_gates"], params["w_hh_t"],
      params["w_out"], params["b_out"])

    return {f"{split}_loss": loss[0, 0]}


# ----------------------------- parameter init ------------------------------
def init_params(key):
    ks = jax.random.split(key, 10)
    scale = 0.1
    return {
        # feature extractor (surrogate linear encoders)
        "wa": scale * jax.random.normal(ks[0], (N_MELS, ModelParams.acoustic_encoding_dim), jnp.float32),
        "ba": jnp.zeros((1, ModelParams.acoustic_encoding_dim), jnp.float32),
        "ws": scale * jax.random.normal(ks[1], (N_FEATS, ModelParams.semantic_encoding_dim), jnp.float32),
        "bs": jnp.zeros((1, ModelParams.semantic_encoding_dim), jnp.float32),
        "wt": scale * jax.random.normal(ks[2], (1, ModelParams.timing_encoding_dim), jnp.float32),
        "bt": jnp.zeros((1, ModelParams.timing_encoding_dim), jnp.float32),
        # timing estimator: LSTM (weights pre-transposed, gate order i,f,g,o)
        # b_gates must equal PyTorch's (b_ih + b_hh) when porting weights.
        "w_ih_t": scale * jax.random.normal(ks[3], (ENC_DIM, 4 * HIDDEN), jnp.float32),
        "w_hh_t": scale * jax.random.normal(ks[4], (HIDDEN, 4 * HIDDEN), jnp.float32),
        "b_gates": jnp.zeros((1, 4 * HIDDEN), jnp.float32),
        # output head Linear(HIDDEN, 1)
        "w_out": scale * jax.random.normal(ks[5], (HIDDEN, 1), jnp.float32),
        "b_out": jnp.zeros((1, 1), jnp.float32),
    }


# ----------------------------- main -----------------------------------------
if __name__ == "__main__":
    B, T = 2, 8
    key = jax.random.PRNGKey(0)
    kp, k1, k2, k3 = jax.random.split(key, 4)

    params = init_params(kp)

    specs = jax.random.normal(k1, (B, T, N_MELS), jnp.float32)        # batch[8]
    feats = jax.random.normal(k2, (B, T, N_FEATS), jnp.float32)       # batch[16]
    # synthetic silence-count timing feature (FeatureExtractor, is_use_silence=True)
    silence = (jnp.arange(T, dtype=jnp.float32)[None, :, None]
               * jnp.ones((B, 1, 1), jnp.float32)) / float(T)
    targets = (jax.random.uniform(k3, (B, T)) > 0.8).astype(jnp.float32)  # batch[7]
    input_lengths = jnp.array([T, T - 2], dtype=jnp.int32)             # batch[9]

    out = baseline_system_forward(params, specs, feats, silence,
                                  targets, input_lengths, split="train")
    jax.block_until_ready(out["train_loss"])
    assert jnp.isfinite(out["train_loss"])
    print("KERNEL_OK")
</pallas_src>

<mosaic_0001>
module attributes {stable_mosaic.version = 11 : i64} {
  func.func @fused_forward_kernel(%arg0: memref<16x64xf32, #tpu.memory_space<vmem>>, %arg1: memref<16x2xf32, #tpu.memory_space<vmem>>, %arg2: memref<64x32xf32, #tpu.memory_space<vmem>>, %arg3: memref<1x32xf32, #tpu.memory_space<vmem>>, %arg4: memref<32x128xf32, #tpu.memory_space<vmem>>, %arg5: memref<1x128xf32, #tpu.memory_space<vmem>>, %arg6: memref<32x128xf32, #tpu.memory_space<vmem>>, %arg7: memref<32x1xf32, #tpu.memory_space<vmem>>, %arg8: memref<1x1xf32, #tpu.memory_space<vmem>>, %arg9: memref<1x1xf32, #tpu.memory_space<vmem>>, %arg10: memref<16x32xf32, #tpu.memory_space<vmem>>) attributes {dimension_semantics = [], scalar_prefetch = 0 : i64, scratch_operands = 1 : i64, tpu.core_type = #tpu.core_type<tc>} {
    %c0 = arith.constant 0 : index
    %c0_0 = arith.constant 0 : index
    %0 = vector.load %arg0[%c0, %c0_0] : memref<16x64xf32, #tpu.memory_space<vmem>>, vector<16x64xf32>
    %c0_1 = arith.constant 0 : index
    %c0_2 = arith.constant 0 : index
    %1 = vector.load %arg2[%c0_1, %c0_2] : memref<64x32xf32, #tpu.memory_space<vmem>>, vector<64x32xf32>
    %cst = arith.constant dense<0.000000e+00> : vector<16x32xf32>
    %2 = tpu.matmul %0, %1, %cst {dimension_numbers = #tpu.dot_dimension_numbers<[1], [0], [0], [1], [0, 0, 1, 1], [], []>} : vector<16x64xf32>, vector<64x32xf32>, vector<16x32xf32> -> vector<16x32xf32>
    %c0_3 = arith.constant 0 : index
    %c0_4 = arith.constant 0 : index
    %3 = vector.load %arg3[%c0_3, %c0_4] : memref<1x32xf32, #tpu.memory_space<vmem>>, vector<1x32xf32>
    %4 = vector.broadcast %3 : vector<1x32xf32> to vector<16x32xf32>
    %5 = arith.addf %2, %4 : vector<16x32xf32>
    %6 = math.tanh %5 : vector<16x32xf32>
    %c0_5 = arith.constant 0 : index
    %c0_6 = arith.constant 0 : index
    %7 = vector.load %arg4[%c0_5, %c0_6] : memref<32x128xf32, #tpu.memory_space<vmem>>, vector<32x128xf32>
    %cst_7 = arith.constant dense<0.000000e+00> : vector<16x128xf32>
    %8 = tpu.matmul %6, %7, %cst_7 {dimension_numbers = #tpu.dot_dimension_numbers<[1], [0], [0], [1], [0, 0, 1, 1], [], []>} : vector<16x32xf32>, vector<32x128xf32>, vector<16x128xf32> -> vector<16x128xf32>
    %c0_8 = arith.constant 0 : index
    %c0_9 = arith.constant 0 : index
    %9 = vector.load %arg5[%c0_8, %c0_9] : memref<1x128xf32, #tpu.memory_space<vmem>>, vector<1x128xf32>
    %10 = vector.broadcast %9 : vector<1x128xf32> to vector<16x128xf32>
    %11 = arith.addf %8, %10 : vector<16x128xf32>
    %c0_10 = arith.constant 0 : index
    %c0_11 = arith.constant 0 : index
    %12 = vector.load %arg6[%c0_10, %c0_11] : memref<32x128xf32, #tpu.memory_space<vmem>>, vector<32x128xf32>
    %cst_12 = arith.constant 0.000000e+00 : f32
    %13 = vector.broadcast %cst_12 : f32 to vector<2x32xf32>
    %cst_13 = arith.constant 0.000000e+00 : f32
    %14 = vector.broadcast %cst_13 : f32 to vector<2x32xf32>
    %15 = vector.extract_strided_slice %11 {offsets = [0, 0], sizes = [2, 128], strides = [1, 1]} : vector<16x128xf32> to vector<2x128xf32>
    %cst_14 = arith.constant dense<0.000000e+00> : vector<2x128xf32>
    %16 = tpu.matmul %13, %12, %cst_14 {dimension_numbers = #tpu.dot_dimension_numbers<[1], [0], [0], [1], [0, 0, 1, 1], [], []>} : vector<2x32xf32>, vector<32x128xf32>, vector<2x128xf32> -> vector<2x128xf32>
    %17 = arith.addf %15, %16 : vector<2x128xf32>
    %18 = vector.extract_strided_slice %17 {offsets = [0, 0], sizes = [2, 32], strides = [1, 1]} : vector<2x128xf32> to vector<2x32xf32>
    %19 = arith.negf %18 : vector<2x32xf32>
    %20 = math.exp %19 : vector<2x32xf32>
    %cst_15 = arith.constant 1.000000e+00 : f32
    %21 = vector.broadcast %cst_15 : f32 to vector<2x32xf32>
    %22 = arith.addf %21, %20 : vector<2x32xf32>
    %23 = arith.divf %21, %22 : vector<2x32xf32>
    %24 = vector.extract_strided_slice %17 {offsets = [0, 32], sizes = [2, 32], strides = [1, 1]} : vector<2x128xf32> to vector<2x32xf32>
    %25 = arith.negf %24 : vector<2x32xf32>
    %26 = math.exp %25 : vector<2x32xf32>
    %cst_16 = arith.constant 1.000000e+00 : f32
    %27 = vector.broadcast %cst_16 : f32 to vector<2x32xf32>
    %28 = arith.addf %27, %26 : vector<2x32xf32>
    %29 = arith.divf %27, %28 : vector<2x32xf32>
    %30 = vector.extract_strided_slice %17 {offsets = [0, 64], sizes = [2, 32], strides = [1, 1]} : vector<2x128xf32> to vector<2x32xf32>
    %31 = math.tanh %30 : vector<2x32xf32>
    %32 = vector.extract_strided_slice %17 {offsets = [0, 96], sizes = [2, 32], strides = [1, 1]} : vector<2x128xf32> to vector<2x32xf32>
    %33 = arith.negf %32 : vector<2x32xf32>
    %34 = math.exp %33 : vector<2x32xf32>
    %cst_17 = arith.constant 1.000000e+00 : f32
    %35 = vector.broadcast %cst_17 : f32 to vector<2x32xf32>
    %36 = arith.addf %35, %34 : vector<2x32xf32>
    %37 = arith.divf %35, %36 : vector<2x32xf32>
    %38 = arith.mulf %29, %14 : vector<2x32xf32>
    %39 = arith.mulf %23, %31 : vector<2x32xf32>
    %40 = arith.addf %38, %39 : vector<2x32xf32>
    %41 = math.tanh %40 : vector<2x32xf32>
    %42 = arith.mulf %37, %41 : vector<2x32xf32>
    %c0_18 = arith.constant 0 : index
    %c0_19 = arith.constant 0 : index
    %43 = vector.load %arg10[%c0_18, %c0_19] : memref<16x32xf32, #tpu.memory_space<vmem>>, vector<2x32xf32>
    tpu.vector_store %arg10[%c0_18, %c0_19], %42 {strides = array<i32>} : memref<16x32xf32, #tpu.memory_space<vmem>>, vector<2x32xf32>,
    %44 = vector.extract_strided_slice %11 {offsets = [2, 0], sizes = [2, 128], strides = [1, 1]} : vector<16x128xf32> to vector<2x128xf32>
    %cst_20 = arith.constant dense<0.000000e+00> : vector<2x128xf32>
    %45 = tpu.matmul %42, %12, %cst_20 {dimension_numbers = #tpu.dot_dimension_numbers<[1], [0], [0], [1], [0, 0, 1, 1], [], []>} : vector<2x32xf32>, vector<32x128xf32>, vector<2x128xf32> -> vector<2x128xf32>
    %46 = arith.addf %44, %45 : vector<2x128xf32>
    %47 = vector.extract_strided_slice %46 {offsets = [0, 0], sizes = [2, 32], strides = [1, 1]} : vector<2x128xf32> to vector<2x32xf32>
    %48 = arith.negf %47 : vector<2x32xf32>
    %49 = math.exp %48 : vector<2x32xf32>
    %cst_21 = arith.constant 1.000000e+00 : f32
    %50 = vector.broadcast %cst_21 : f32 to vector<2x32xf32>
    %51 = arith.addf %50, %49 : vector<2x32xf32>
    %52 = arith.divf %50, %51 : vector<2x32xf32>
    %53 = vector.extract_strided_slice %46 {offsets = [0, 32], sizes = [2, 32], strides = [1, 1]} : vector<2x128xf32> to vector<2x32xf32>
    %54 = arith.negf %53 : vector<2x32xf32>
    %55 = math.exp %54 : vector<2x32xf32>
    %cst_22 = arith.constant 1.000000e+00 : f32
    %56 = vector.broadcast %cst_22 : f32 to vector<2x32xf32>
    %57 = arith.addf %56, %55 : vector<2x32xf32>
    %58 = arith.divf %56, %57 : vector<2x32xf32>
    %59 = vector.extract_strided_slice %46 {offsets = [0, 64], sizes = [2, 32], strides = [1, 1]} : vector<2x128xf32> to vector<2x32xf32>
    %60 = math.tanh %59 : vector<2x32xf32>
    %61 = vector.extract_strided_slice %46 {offsets = [0, 96], sizes = [2, 32], strides = [1, 1]} : vector<2x128xf32> to vector<2x32xf32>
    %62 = arith.negf %61 : vector<2x32xf32>
    %63 = math.exp %62 : vector<2x32xf32>
    %cst_23 = arith.constant 1.000000e+00 : f32
    %64 = vector.broadcast %cst_23 : f32 to vector<2x32xf32>
    %65 = arith.addf %64, %63 : vector<2x32xf32>
    %66 = arith.divf %64, %65 : vector<2x32xf32>
    %67 = arith.mulf %58, %40 : vector<2x32xf32>
    %68 = arith.mulf %52, %60 : vector<2x32xf32>
    %69 = arith.addf %67, %68 : vector<2x32xf32>
    %70 = math.tanh %69 : vector<2x32xf32>
    %71 = arith.mulf %66, %70 : vector<2x32xf32>
    %c2 = arith.constant 2 : index
    %c0_24 = arith.constant 0 : index
    %72 = vector.load %arg10[%c2, %c0_24] : memref<16x32xf32, #tpu.memory_space<vmem>>, vector<2x32xf32>
    tpu.vector_store %arg10[%c2, %c0_24], %71 {strides = array<i32>} : memref<16x32xf32, #tpu.memory_space<vmem>>, vector<2x32xf32>,
    %73 = vector.extract_strided_slice %11 {offsets = [4, 0], sizes = [2, 128], strides = [1, 1]} : vector<16x128xf32> to vector<2x128xf32>
    %cst_25 = arith.constant dense<0.000000e+00> : vector<2x128xf32>
    %74 = tpu.matmul %71, %12, %cst_25 {dimension_numbers = #tpu.dot_dimension_numbers<[1], [0], [0], [1], [0, 0, 1, 1], [], []>} : vector<2x32xf32>, vector<32x128xf32>, vector<2x128xf32> -> vector<2x128xf32>
    %75 = arith.addf %73, %74 : vector<2x128xf32>
    %76 = vector.extract_strided_slice %75 {offsets = [0, 0], sizes = [2, 32], strides = [1, 1]} : vector<2x128xf32> to vector<2x32xf32>
    %77 = arith.negf %76 : vector<2x32xf32>
    %78 = math.exp %77 : vector<2x32xf32>
    %cst_26 = arith.constant 1.000000e+00 : f32
    %79 = vector.broadcast %cst_26 : f32 to vector<2x32xf32>
    %80 = arith.addf %79, %78 : vector<2x32xf32>
    %81 = arith.divf %79, %80 : vector<2x32xf32>
    %82 = vector.extract_strided_slice %75 {offsets = [0, 32], sizes = [2, 32], strides = [1, 1]} : vector<2x128xf32> to vector<2x32xf32>
    %83 = arith.negf %82 : vector<2x32xf32>
    %84 = math.exp %83 : vector<2x32xf32>
    %cst_27 = arith.constant 1.000000e+00 : f32
    %85 = vector.broadcast %cst_27 : f32 to vector<2x32xf32>
    %86 = arith.addf %85, %84 : vector<2x32xf32>
    %87 = arith.divf %85, %86 : vector<2x32xf32>
    %88 = vector.extract_strided_slice %75 {offsets = [0, 64], sizes = [2, 32], strides = [1, 1]} : vector<2x128xf32> to vector<2x32xf32>
    %89 = math.tanh %88 : vector<2x32xf32>
    %90 = vector.extract_strided_slice %75 {offsets = [0, 96], sizes = [2, 32], strides = [1, 1]} : vector<2x128xf32> to vector<2x32xf32>
    %91 = arith.negf %90 : vector<2x32xf32>
    %92 = math.exp %91 : vector<2x32xf32>
    %cst_28 = arith.constant 1.000000e+00 : f32
    %93 = vector.broadcast %cst_28 : f32 to vector<2x32xf32>
    %94 = arith.addf %93, %92 : vector<2x32xf32>
    %95 = arith.divf %93, %94 : vector<2x32xf32>
    %96 = arith.mulf %87, %69 : vector<2x32xf32>
    %97 = arith.mulf %81, %89 : vector<2x32xf32>
    %98 = arith.addf %96, %97 : vector<2x32xf32>
    %99 = math.tanh %98 : vector<2x32xf32>
    %100 = arith.mulf %95, %99 : vector<2x32xf32>
    %c4 = arith.constant 4 : index
    %c0_29 = arith.constant 0 : index
    %101 = vector.load %arg10[%c4, %c0_29] : memref<16x32xf32, #tpu.memory_space<vmem>>, vector<2x32xf32>
    tpu.vector_store %arg10[%c4, %c0_29], %100 {strides = array<i32>} : memref<16x32xf32, #tpu.memory_space<vmem>>, vector<2x32xf32>,
    %102 = vector.extract_strided_slice %11 {offsets = [6, 0], sizes = [2, 128], strides = [1, 1]} : vector<16x128xf32> to vector<2x128xf32>
    %cst_30 = arith.constant dense<0.000000e+00> : vector<2x128xf32>
    %103 = tpu.matmul %100, %12, %cst_30 {dimension_numbers = #tpu.dot_dimension_numbers<[1], [0], [0], [1], [0, 0, 1, 1], [], []>} : vector<2x32xf32>, vector<32x128xf32>, vector<2x128xf32> -> vector<2x128xf32>
    %104 = arith.addf %102, %103 : vector<2x128xf32>
    %105 = vector.extract_strided_slice %104 {offsets = [0, 0], sizes = [2, 32], strides = [1, 1]} : vector<2x128xf32> to vector<2x32xf32>
    %106 = arith.negf %105 : vector<2x32xf32>
    %107 = math.exp %106 : vector<2x32xf32>
    %cst_31 = arith.constant 1.000000e+00 : f32
    %108 = vector.broadcast %cst_31 : f32 to vector<2x32xf32>
    %109 = arith.addf %108, %107 : vector<2x32xf32>
    %110 = arith.divf %108, %109 : vector<2x32xf32>
    %111 = vector.extract_strided_slice %104 {offsets = [0, 32], sizes = [2, 32], strides = [1, 1]} : vector<2x128xf32> to vector<2x32xf32>
    %112 = arith.negf %111 : vector<2x32xf32>
    %113 = math.exp %112 : vector<2x32xf32>
    %cst_32 = arith.constant 1.000000e+00 : f32
    %114 = vector.broadcast %cst_32 : f32 to vector<2x32xf32>
    %115 = arith.addf %114, %113 : vector<2x32xf32>
    %116 = arith.divf %114, %115 : vector<2x32xf32>
    %117 = vector.extract_strided_slice %104 {offsets = [0, 64], sizes = [2, 32], strides = [1, 1]} : vector<2x128xf32> to vector<2x32xf32>
    %118 = math.tanh %117 : vector<2x32xf32>
    %119 = vector.extract_strided_slice %104 {offsets = [0, 96], sizes = [2, 32], strides = [1, 1]} : vector<2x128xf32> to vector<2x32xf32>
    %120 = arith.negf %119 : vector<2x32xf32>
    %121 = math.exp %120 : vector<2x32xf32>
    %cst_33 = arith.constant 1.000000e+00 : f32
    %122 = vector.broadcast %cst_33 : f32 to vector<2x32xf32>
    %123 = arith.addf %122, %121 : vector<2x32xf32>
    %124 = arith.divf %122, %123 : vector<2x32xf32>
    %125 = arith.mulf %116, %98 : vector<2x32xf32>
    %126 = arith.mulf %110, %118 : vector<2x32xf32>
    %127 = arith.addf %125, %126 : vector<2x32xf32>
    %128 = math.tanh %127 : vector<2x32xf32>
    %129 = arith.mulf %124, %128 : vector<2x32xf32>
    %c6 = arith.constant 6 : index
    %c0_34 = arith.constant 0 : index
    %130 = vector.load %arg10[%c6, %c0_34] : memref<16x32xf32, #tpu.memory_space<vmem>>, vector<2x32xf32>
    tpu.vector_store %arg10[%c6, %c0_34], %129 {strides = array<i32>} : memref<16x32xf32, #tpu.memory_space<vmem>>, vector<2x32xf32>,
    %131 = vector.extract_strided_slice %11 {offsets = [8, 0], sizes = [2, 128], strides = [1, 1]} : vector<16x128xf32> to vector<2x128xf32>
    %cst_35 = arith.constant dense<0.000000e+00> : vector<2x128xf32>
    %132 = tpu.matmul %129, %12, %cst_35 {dimension_numbers = #tpu.dot_dimension_numbers<[1], [0], [0], [1], [0, 0, 1, 1], [], []>} : vector<2x32xf32>, vector<32x128xf32>, vector<2x128xf32> -> vector<2x128xf32>
    %133 = arith.addf %131, %132 : vector<2x128xf32>
    %134 = vector.extract_strided_slice %133 {offsets = [0, 0], sizes = [2, 32], strides = [1, 1]} : vector<2x128xf32> to vector<2x32xf32>
    %135 = arith.negf %134 : vector<2x32xf32>
    %136 = math.exp %135 : vector<2x32xf32>
    %cst_36 = arith.constant 1.000000e+00 : f32
    %137 = vector.broadcast %cst_36 : f32 to vector<2x32xf32>
    %138 = arith.addf %137, %136 : vector<2x32xf32>
    %139 = arith.divf %137, %138 : vector<2x32xf32>
    %140 = vector.extract_strided_slice %133 {offsets = [0, 32], sizes = [2, 32], strides = [1, 1]} : vector<2x128xf32> to vector<2x32xf32>
    %141 = arith.negf %140 : vector<2x32xf32>
    %142 = math.exp %141 : vector<2x32xf32>
    %cst_37 = arith.constant 1.000000e+00 : f32
    %143 = vector.broadcast %cst_37 : f32 to vector<2x32xf32>
    %144 = arith.addf %143, %142 : vector<2x32xf32>
    %145 = arith.divf %143, %144 : vector<2x32xf32>
    %146 = vector.extract_strided_slice %133 {offsets = [0, 64], sizes = [2, 32], strides = [1, 1]} : vector<2x128xf32> to vector<2x32xf32>
    %147 = math.tanh %146 : vector<2x32xf32>
    %148 = vector.extract_strided_slice %133 {offsets = [0, 96], sizes = [2, 32], strides = [1, 1]} : vector<2x128xf32> to vector<2x32xf32>
    %149 = arith.negf %148 : vector<2x32xf32>
    %150 = math.exp %149 : vector<2x32xf32>
    %cst_38 = arith.constant 1.000000e+00 : f32
    %151 = vector.broadcast %cst_38 : f32 to vector<2x32xf32>
    %152 = arith.addf %151, %150 : vector<2x32xf32>
    %153 = arith.divf %151, %152 : vector<2x32xf32>
    %154 = arith.mulf %145, %127 : vector<2x32xf32>
    %155 = arith.mulf %139, %147 : vector<2x32xf32>
    %156 = arith.addf %154, %155 : vector<2x32xf32>
    %157 = math.tanh %156 : vector<2x32xf32>
    %158 = arith.mulf %153, %157 : vector<2x32xf32>
    %c8 = arith.constant 8 : index
    %c0_39 = arith.constant 0 : index
    %159 = vector.load %arg10[%c8, %c0_39] : memref<16x32xf32, #tpu.memory_space<vmem>>, vector<2x32xf32>
    tpu.vector_store %arg10[%c8, %c0_39], %158 {strides = array<i32>} : memref<16x32xf32, #tpu.memory_space<vmem>>, vector<2x32xf32>,
    %160 = vector.extract_strided_slice %11 {offsets = [10, 0], sizes = [2, 128], strides = [1, 1]} : vector<16x128xf32> to vector<2x128xf32>
    %cst_40 = arith.constant dense<0.000000e+00> : vector<2x128xf32>
    %161 = tpu.matmul %158, %12, %cst_40 {dimension_numbers = #tpu.dot_dimension_numbers<[1], [0], [0], [1], [0, 0, 1, 1], [], []>} : vector<2x32xf32>, vector<32x128xf32>, vector<2x128xf32> -> vector<2x128xf32>
    %162 = arith.addf %160, %161 : vector<2x128xf32>
    %163 = vector.extract_strided_slice %162 {offsets = [0, 0], sizes = [2, 32], strides = [1, 1]} : vector<2x128xf32> to vector<2x32xf32>
    %164 = arith.negf %163 : vector<2x32xf32>
    %165 = math.exp %164 : vector<2x32xf32>
    %cst_41 = arith.constant 1.000000e+00 : f32
    %166 = vector.broadcast %cst_41 : f32 to vector<2x32xf32>
    %167 = arith.addf %166, %165 : vector<2x32xf32>
    %168 = arith.divf %166, %167 : vector<2x32xf32>
    %169 = vector.extract_strided_slice %162 {offsets = [0, 32], sizes = [2, 32], strides = [1, 1]} : vector<2x128xf32> to vector<2x32xf32>
    %170 = arith.negf %169 : vector<2x32xf32>
    %171 = math.exp %170 : vector<2x32xf32>
    %cst_42 = arith.constant 1.000000e+00 : f32
    %172 = vector.broadcast %cst_42 : f32 to vector<2x32xf32>
    %173 = arith.addf %172, %171 : vector<2x32xf32>
    %174 = arith.divf %172, %173 : vector<2x32xf32>
    %175 = vector.extract_strided_slice %162 {offsets = [0, 64], sizes = [2, 32], strides = [1, 1]} : vector<2x128xf32> to vector<2x32xf32>
    %176 = math.tanh %175 : vector<2x32xf32>
    %177 = vector.extract_strided_slice %162 {offsets = [0, 96], sizes = [2, 32], strides = [1, 1]} : vector<2x128xf32> to vector<2x32xf32>
    %178 = arith.negf %177 : vector<2x32xf32>
    %179 = math.exp %178 : vector<2x32xf32>
    %cst_43 = arith.constant 1.000000e+00 : f32
    %180 = vector.broadcast %cst_43 : f32 to vector<2x32xf32>
    %181 = arith.addf %180, %179 : vector<2x32xf32>
    %182 = arith.divf %180, %181 : vector<2x32xf32>
    %183 = arith.mulf %174, %156 : vector<2x32xf32>
    %184 = arith.mulf %168, %176 : vector<2x32xf32>
    %185 = arith.addf %183, %184 : vector<2x32xf32>
    %186 = math.tanh %185 : vector<2x32xf32>
    %187 = arith.mulf %182, %186 : vector<2x32xf32>
    %c10 = arith.constant 10 : index
    %c0_44 = arith.constant 0 : index
    %188 = vector.load %arg10[%c10, %c0_44] : memref<16x32xf32, #tpu.memory_space<vmem>>, vector<2x32xf32>
    tpu.vector_store %arg10[%c10, %c0_44], %187 {strides = array<i32>} : memref<16x32xf32, #tpu.memory_space<vmem>>, vector<2x32xf32>,
    %189 = vector.extract_strided_slice %11 {offsets = [12, 0], sizes = [2, 128], strides = [1, 1]} : vector<16x128xf32> to vector<2x128xf32>
    %cst_45 = arith.constant dense<0.000000e+00> : vector<2x128xf32>
    %190 = tpu.matmul %187, %12, %cst_45 {dimension_numbers = #tpu.dot_dimension_numbers<[1], [0], [0], [1], [0, 0, 1, 1], [], []>} : vector<2x32xf32>, vector<32x128xf32>, vector<2x128xf32> -> vector<2x128xf32>
    %191 = arith.addf %189, %190 : vector<2x128xf32>
    %192 = vector.extract_strided_slice %191 {offsets = [0, 0], sizes = [2, 32], strides = [1, 1]} : vector<2x128xf32> to vector<2x32xf32>
    %193 = arith.negf %192 : vector<2x32xf32>
    %194 = math.exp %193 : vector<2x32xf32>
    %cst_46 = arith.constant 1.000000e+00 : f32
    %195 = vector.broadcast %cst_46 : f32 to vector<2x32xf32>
    %196 = arith.addf %195, %194 : vector<2x32xf32>
    %197 = arith.divf %195, %196 : vector<2x32xf32>
    %198 = vector.extract_strided_slice %191 {offsets = [0, 32], sizes = [2, 32], strides = [1, 1]} : vector<2x128xf32> to vector<2x32xf32>
    %199 = arith.negf %198 : vector<2x32xf32>
    %200 = math.exp %199 : vector<2x32xf32>
    %cst_47 = arith.constant 1.000000e+00 : f32
    %201 = vector.broadcast %cst_47 : f32 to vector<2x32xf32>
    %202 = arith.addf %201, %200 : vector<2x32xf32>
    %203 = arith.divf %201, %202 : vector<2x32xf32>
    %204 = vector.extract_strided_slice %191 {offsets = [0, 64], sizes = [2, 32], strides = [1, 1]} : vector<2x128xf32> to vector<2x32xf32>
    %205 = math.tanh %204 : vector<2x32xf32>
    %206 = vector.extract_strided_slice %191 {offsets = [0, 96], sizes = [2, 32], strides = [1, 1]} : vector<2x128xf32> to vector<2x32xf32>
    %207 = arith.negf %206 : vector<2x32xf32>
    %208 = math.exp %207 : vector<2x32xf32>
    %cst_48 = arith.constant 1.000000e+00 : f32
    %209 = vector.broadcast %cst_48 : f32 to vector<2x32xf32>
    %210 = arith.addf %209, %208 : vector<2x32xf32>
    %211 = arith.divf %209, %210 : vector<2x32xf32>
    %212 = arith.mulf %203, %185 : vector<2x32xf32>
    %213 = arith.mulf %197, %205 : vector<2x32xf32>
    %214 = arith.addf %212, %213 : vector<2x32xf32>
    %215 = math.tanh %214 : vector<2x32xf32>
    %216 = arith.mulf %211, %215 : vector<2x32xf32>
    %c12 = arith.constant 12 : index
    %c0_49 = arith.constant 0 : index
    %217 = vector.load %arg10[%c12, %c0_49] : memref<16x32xf32, #tpu.memory_space<vmem>>, vector<2x32xf32>
    tpu.vector_store %arg10[%c12, %c0_49], %216 {strides = array<i32>} : memref<16x32xf32, #tpu.memory_space<vmem>>, vector<2x32xf32>,
    %218 = vector.extract_strided_slice %11 {offsets = [14, 0], sizes = [2, 128], strides = [1, 1]} : vector<16x128xf32> to vector<2x128xf32>
    %cst_50 = arith.constant dense<0.000000e+00> : vector<2x128xf32>
    %219 = tpu.matmul %216, %12, %cst_50 {dimension_numbers = #tpu.dot_dimension_numbers<[1], [0], [0], [1], [0, 0, 1, 1], [], []>} : vector<2x32xf32>, vector<32x128xf32>, vector<2x128xf32> -> vector<2x128xf32>
    %220 = arith.addf %218, %219 : vector<2x128xf32>
    %221 = vector.extract_strided_slice %220 {offsets = [0, 0], sizes = [2, 32], strides = [1, 1]} : vector<2x128xf32> to vector<2x32xf32>
    %222 = arith.negf %221 : vector<2x32xf32>
    %223 = math.exp %222 : vector<2x32xf32>
    %cst_51 = arith.constant 1.000000e+00 : f32
    %224 = vector.broadcast %cst_51 : f32 to vector<2x32xf32>
    %225 = arith.addf %224, %223 : vector<2x32xf32>
    %226 = arith.divf %224, %225 : vector<2x32xf32>
    %227 = vector.extract_strided_slice %220 {offsets = [0, 32], sizes = [2, 32], strides = [1, 1]} : vector<2x128xf32> to vector<2x32xf32>
    %228 = arith.negf %227 : vector<2x32xf32>
    %229 = math.exp %228 : vector<2x32xf32>
    %cst_52 = arith.constant 1.000000e+00 : f32
    %230 = vector.broadcast %cst_52 : f32 to vector<2x32xf32>
    %231 = arith.addf %230, %229 : vector<2x32xf32>
    %232 = arith.divf %230, %231 : vector<2x32xf32>
    %233 = vector.extract_strided_slice %220 {offsets = [0, 64], sizes = [2, 32], strides = [1, 1]} : vector<2x128xf32> to vector<2x32xf32>
    %234 = math.tanh %233 : vector<2x32xf32>
    %235 = vector.extract_strided_slice %220 {offsets = [0, 96], sizes = [2, 32], strides = [1, 1]} : vector<2x128xf32> to vector<2x32xf32>
    %236 = arith.negf %235 : vector<2x32xf32>
    %237 = math.exp %236 : vector<2x32xf32>
    %cst_53 = arith.constant 1.000000e+00 : f32
    %238 = vector.broadcast %cst_53 : f32 to vector<2x32xf32>
    %239 = arith.addf %238, %237 : vector<2x32xf32>
    %240 = arith.divf %238, %239 : vector<2x32xf32>
    %241 = arith.mulf %232, %214 : vector<2x32xf32>
    %242 = arith.mulf %226, %234 : vector<2x32xf32>
    %243 = arith.addf %241, %242 : vector<2x32xf32>
    %244 = math.tanh %243 : vector<2x32xf32>
    %245 = arith.mulf %240, %244 : vector<2x32xf32>
    %c14 = arith.constant 14 : index
    %c0_54 = arith.constant 0 : index
    %246 = vector.load %arg10[%c14, %c0_54] : memref<16x32xf32, #tpu.memory_space<vmem>>, vector<2x32xf32>
    tpu.vector_store %arg10[%c14, %c0_54], %245 {strides = array<i32>} : memref<16x32xf32, #tpu.memory_space<vmem>>, vector<2x32xf32>,
    %c0_55 = arith.constant 0 : index
    %c0_56 = arith.constant 0 : index
    %247 = vector.load %arg10[%c0_55, %c0_56] : memref<16x32xf32, #tpu.memory_space<vmem>>, vector<16x32xf32>
    %c0_57 = arith.constant 0 : index
    %c0_58 = arith.constant 0 : index
    %248 = vector.load %arg7[%c0_57, %c0_58] : memref<32x1xf32, #tpu.memory_space<vmem>>, vector<32x1xf32>
    %cst_59 = arith.constant dense<0.000000e+00> : vector<16x1xf32>
    %249 = tpu.matmul %247, %248, %cst_59 {dimension_numbers = #tpu.dot_dimension_numbers<[1], [0], [0], [1], [0, 0, 1, 1], [], []>} : vector<16x32xf32>, vector<32x1xf32>, vector<16x1xf32> -> vector<16x1xf32>
    %c0_60 = arith.constant 0 : index
    %c0_61 = arith.constant 0 : index
    %250 = vector.load %arg8[%c0_60, %c0_61] : memref<1x1xf32, #tpu.memory_space<vmem>>, vector<1x1xf32>
    %251 = vector.broadcast %250 : vector<1x1xf32> to vector<16x1xf32>
    %252 = arith.addf %249, %251 : vector<16x1xf32>
    %c0_62 = arith.constant 0 : index
    %c0_63 = arith.constant 0 : index
    %253 = vector.load %arg1[%c0_62, %c0_63] : memref<16x2xf32, #tpu.memory_space<vmem>>, vector<16x1xf32>
    %c0_64 = arith.constant 0 : index
    %c1 = arith.constant 1 : index
    %254 = vector.load %arg1[%c0_64, %c1] : memref<16x2xf32, #tpu.memory_space<vmem>>, vector<16x1xf32>
    %cst_65 = arith.constant 0.000000e+00 : f32
    %255 = vector.broadcast %cst_65 : f32 to vector<16x1xf32>
    %256 = arith.maximumf %252, %255 : vector<16x1xf32>
    %257 = arith.mulf %252, %253 : vector<16x1xf32>
    %258 = arith.subf %256, %257 : vector<16x1xf32>
    %259 = math.absf %252 : vector<16x1xf32>
    %cst_66 = arith.constant 0.000000e+00 : f32
    %260 = vector.broadcast %cst_66 : f32 to vector<16x1xf32>
    %261 = arith.subf %260, %259 : vector<16x1xf32>
    %262 = math.exp %261 : vector<16x1xf32>
    %cst_67 = arith.constant 1.000000e+00 : f32
    %263 = vector.broadcast %cst_67 : f32 to vector<16x1xf32>
    %264 = arith.addf %263, %262 : vector<16x1xf32>
    %265 = math.log %264 : vector<16x1xf32>
    %266 = arith.addf %258, %265 : vector<16x1xf32>
    %267 = arith.mulf %266, %254 : vector<16x1xf32>
    %268 = vector.shape_cast %267 : vector<16x1xf32> to vector<1x16x1xf32>
    %cst_68 = arith.constant dense<0.000000e+00> : vector<1xf32>
    %269 = vector.multi_reduction <add>, %268, %cst_68 [1, 2] : vector<1x16x1xf32> to vector<1xf32>
    %270 = vector.shape_cast %269 : vector<1xf32> to vector<1x1x1xf32>
    %271 = vector.extract %270[0, 0, 0] : f32 from vector<1x1x1xf32>
    %272 = vector.broadcast %271 : f32 to vector<1x1xf32>
    %c0_69 = arith.constant 0 : index
    %c0_70 = arith.constant 0 : index
    %273 = vector.load %arg9[%c0_69, %c0_70] : memref<1x1xf32, #tpu.memory_space<vmem>>, vector<1x1xf32>
    tpu.vector_store %arg9[%c0_69, %c0_70], %272 {strides = array<i32>} : memref<1x1xf32, #tpu.memory_space<vmem>>, vector<1x1xf32>,
    return
  }
}

</mosaic_0001>

<llo_original>
// kernel: baseline_system_forward.1
$region0: #{baseline_system_forward.1}
  #allocation0 [shape = 'u32[]', space=smem, size = 0x4, offset = 0x4, fixed_abs, tag = 'smem constant byte address 0x4 - core index']
  #allocation1 [shape = 'u32[144,128]{1,0:T(1,128)}', space=vmem, size = 0x12000, scoped, tag = 'internal scratch']
  #allocation2 [shape = 'f32[16,32]{1,0:T(8,128)}', space=vmem, size = 0x2000, scoped, tag = 'scratch operand']
  #allocation3 [shape = 'f32[1,1]{1,0:T(1,128)S(1)}', space=vmem, size = 0x200, scoped, tag = 'scoped memory for baseline_system_forward.1']
  %s0 = inlined_call_operand.vmem [shape: f32[16,64], index: 0, kind: input, shape index: {}]
  %s1 = inlined_call_operand.vmem [shape: f32[16,2], index: 1, kind: input, shape index: {}]
  %s2 = inlined_call_operand.vmem [shape: f32[64,32], index: 2, kind: input, shape index: {}]
  %s3 = inlined_call_operand.vmem [shape: f32[1,32], index: 3, kind: input, shape index: {}]
  %s4 = inlined_call_operand.vmem [shape: f32[32,128], index: 4, kind: input, shape index: {}]
  %s5 = inlined_call_operand.vmem [shape: f32[1,128], index: 5, kind: input, shape index: {}]
  %s6 = inlined_call_operand.vmem [shape: f32[32,128], index: 6, kind: input, shape index: {}]
  %s7 = inlined_call_operand.vmem [shape: f32[32,1], index: 7, kind: input, shape index: {}]
  %s8 = inlined_call_operand.<no memory space> [shape: f32[1,1], index: 8, kind: input, shape index: {}]
  %s9 = inlined_call_operand.hbm [shape: f32[1,1], index: 9, kind: output, shape index: {}]
  %s10 = sld [smem:[#allocation0]]
  $region46: #{baseline_system_forward.1} parent=0
    _
  %s12 = ssub.s32 1, %s10
  %s13 = scalar_select 0, %s12, %s10
  %v14 = vstv %s8
  %15 = vst [vmem:[#allocation3] sm:$0x1] %v14
  $region1: #{baseline_system_forward.1} parent=0
    #allocation4 [shape = 'u8[512]{0}', space=vmem, size = 0x400, scoped, tag = 'output window, operand 0, single buffered']
    #allocation5 [shape = 's32[1]{0}', space=sflag, size = 0x4, scoped, tag = 'scoped memory for baseline_system_forward.1']
    %16 = vsyncpa [#allocation5], 0
    // Predicated region
    $region2: #{baseline_system_forward.1} parent=1 // pred_check
      _
    $region3: #{baseline_system_forward.1} parent=1 // pred_check_branch
      %18 = sbr.rel (0) target = $region5
    $region4: #{baseline_system_forward.1} parent=1 // pred_region
      _
    $region5: #{baseline_system_forward.1} parent=1 // pred_fallthru
      _
    // Predicated region
    $region6: #{baseline_system_forward.1} parent=1 // pred_check
      _
    $region7: #{baseline_system_forward.1} parent=1 // pred_check_branch
      %20 = sbr.rel (0) target = $region9
    $region8: #{baseline_system_forward.1} parent=1 // pred_region
      _
    $region9: #{baseline_system_forward.1} parent=1 // pred_fallthru
      _
    // Predicated region
    $region10: #{baseline_system_forward.1} parent=1 // pred_check
      _
    $region11: #{baseline_system_forward.1} parent=1 // pred_check_branch
      %22 = sbr.rel (0) target = $region13
    $region12: #{baseline_system_forward.1} parent=1 // pred_region
      _
    $region13: #{baseline_system_forward.1} parent=1 // pred_fallthru
      _
    // Predicated region
    $region14: #{baseline_system_forward.1} parent=1 // pred_check
      _
    $region15: #{baseline_system_forward.1} parent=1 // pred_check_branch
      %24 = sbr.rel (0) target = $region17
    $region16: #{baseline_system_forward.1} parent=1 // pred_region
      _
    $region17: #{baseline_system_forward.1} parent=1 // pred_fallthru
      _
    // Predicated region
    $region18: #{baseline_system_forward.1} parent=1 // pred_check
      _
    $region19: #{baseline_system_forward.1} parent=1 // pred_check_branch
      %26 = sbr.rel (0) target = $region21
    $region20: #{baseline_system_forward.1} parent=1 // pred_region
      _
    $region21: #{baseline_system_forward.1} parent=1 // pred_fallthru
      _
    // Predicated region
    $region22: #{baseline_system_forward.1} parent=1 // pred_check
      _
    $region23: #{baseline_system_forward.1} parent=1 // pred_check_branch
      %28 = sbr.rel (0) target = $region25
    $region24: #{baseline_system_forward.1} parent=1 // pred_region
      _
    $region25: #{baseline_system_forward.1} parent=1 // pred_fallthru
      _
    // Predicated region
    $region26: #{baseline_system_forward.1} parent=1 // pred_check
      _
    $region27: #{baseline_system_forward.1} parent=1 // pred_check_branch
      %30 = sbr.rel (0) target = $region29
    $region28: #{baseline_system_forward.1} parent=1 // pred_region
      _
    $region29: #{baseline_system_forward.1} parent=1 // pred_fallthru
      _
    // Predicated region
    $region30: #{baseline_system_forward.1} parent=1 // pred_check
      _
    $region31: #{baseline_system_forward.1} parent=1 // pred_check_branch
      %32 = sbr.rel (0) target = $region33
    $region32: #{baseline_system_forward.1} parent=1 // pred_region
      _
    $region33: #{baseline_system_forward.1} parent=1 // pred_fallthru
      _
    // Predicated region
    $region34: #{baseline_system_forward.1} parent=1 // pred_check
      _
    $region35: #{baseline_system_forward.1} parent=1 // pred_check_branch
      %34 = sbr.rel (0) target = $region37
    $region36: #{baseline_system_forward.1} parent=1 // pred_region
      _
    $region37: #{baseline_system_forward.1} parent=1 // pred_fallthru
      _
    %v35 = vld [vmem:[%s0] sm:$0xff]
    %v36 = vld [vmem:[%s0 + $0x8] sm:$0xff]
    %v37 = vld [vmem:[%s2] sm:$0xff]
    %v38 = vld [vmem:[%s2 + $0x8] sm:$0xff]
    %v39 = vld [vmem:[%s2 + $0x10] sm:$0xff]
    %v40 = vld [vmem:[%s2 + $0x18] sm:$0xff]
    %v41 = vld [vmem:[%s2 + $0x20] sm:$0xff]
    %v42 = vld [vmem:[%s2 + $0x28] sm:$0xff]
    %v43 = vld [vmem:[%s2 + $0x30] sm:$0xff]
    %v44 = vld [vmem:[%s2 + $0x38] sm:$0xff]
    %v45 = vld [vmem:[%s3] sm:$0x1]
    %v47 = vlaneseq
    %v48 = vshrl.u32 %v47, 7
    %v49 = vsub.s32 0, %v48
    %v50 = vrot.slane %v45, %v49
    %vm52 = vcmask 523264
    %v54 = vsel %vm52, %v35, 0
    %v57 = vsel %vm52, %v36, 0
    %59 = vmatprep.subr.mxu0 0.0
    %60 = vmatpush1.msra.mxu0 %v37
    %61 = vmatprep.subr.mxu0 0.0
    %62 = vmatpush1.msra.mxu0 %v38
    %63 = vmatprep.subr.mxu0 0.0
    %64 = vmatpush1.msra.mxu0 %v39
    %65 = vmatprep.subr.mxu0 0.0
    %66 = vmatpush1.msra.mxu0 %v40
    %67 = vmatprep.subr.mxu0 0.0
    %68 = vmatpush1.msra.mxu0 %v41
    %69 = vmatprep.subr.mxu0 0.0
    %70 = vmatpush1.msra.mxu0 %v42
    %71 = vmatprep.subr.mxu0 0.0
    %72 = vmatpush1.msra.mxu0 %v43
    %73 = vmatprep.subr.mxu0 0.0
    %74 = vmatpush1.msra.mxu0 %v44
    %75 = vmatprep.subr.mxu0 0.0
    %76 = vmatpush1.msra.mxu0 0.0
    %77 = vmatprep.subr.mxu0 0.0
    %78 = vmatpush1.msra.mxu0 0.0
    %79 = vmatprep.subr.mxu0 0.0
    %80 = vmatpush1.msra.mxu0 0.0
    %81 = vmatprep.subr.mxu0 0.0
    %82 = vmatpush1.msra.mxu0 0.0
    %83 = vmatprep.subr.mxu0 0.0
    %84 = vmatpush1.msra.mxu0 0.0
    %85 = vmatprep.subr.mxu0 0.0
    %86 = vmatpush1.msra.mxu0 0.0
    %87 = vmatprep.subr.mxu0 0.0
    %88 = vmatpush1.msra.mxu0 0.0
    %89 = vmatprep.subr.mxu0 0.0
    %90 = vmatpush1.msra.mxu0 0.0
    %91 = vmatprep.subr.mxu0 0.0
    %92 = vmatpush1.msra.mxu0 0.0
    %93 = vmatprep.subr.mxu0 0.0
    %94 = vmatpush1.msra.mxu0 0.0
    %95 = vmatprep.subr.mxu0 0.0
    %96 = vmatpush1.msra.mxu0 0.0
    %97 = vmatprep.subr.mxu0 0.0
    %98 = vmatpush1.msra.mxu0 0.0
    %99 = vmatprep.subr.mxu0 0.0
    %100 = vmatpush1.msra.mxu0 0.0
    %101 = vmatprep.subr.mxu0 0.0
    %102 = vmatpush1.msra.mxu0 0.0
    %103 = vmatprep.subr.mxu0 0.0
    %104 = vmatpush1.msra.mxu0 0.0
    %105 = vmatprep.subr.mxu0 0.0
    %106 = vmatpush1.msra.mxu0 0.0
    %107 = vmatprep.subr.mxu0 0.0
    %108 = vmatpush1.msra.mxu0 0.0
    %109 = vmatprep.subr.mxu0 0.0
    %110 = vmatpush1.msra.mxu0 0.0
    %111 = vmatprep.subr.mxu0 0.0
    %112 = vmatpush1.msra.mxu0 0.0
    %113 = vmatprep.subr.mxu0 0.0
    %114 = vmatpush1.msra.mxu0 0.0
    %115 = vmatprep.subr.mxu0 0.0
    %116 = vmatpush1.msra.mxu0 0.0
    %117 = vmatprep.subr.mxu0 0.0
    %118 = vmatpush1.msra.mxu0 0.0
    %119 = vmatprep.subr.mxu0 0.0
    %120 = vmatpush1.msra.mxu0 0.0
    %121 = vmatprep.subr.mxu0 0.0
    %122 = vmatpush1.msra.mxu0 0.0
    %123 = vmatprep.mubr.f32.mxu0 0.0
    %124 = vmatmul.mubr.f32.gmra.mrb[0].mxu0 %v54
    %v125 = vpop.f32.mrb[0].mxu0
    %v126 = vadd.f32 %v50, %v125
    %v127 = vpop.f32.mrb[0].mxu0
    %128 = vmatprep.mubr.f32.mxu0 0.0
    %129 = vmatmul.mubr.f32.gmra.mrb[0].mxu0 %v57
    %v130 = vpop.f32.mrb[0].mxu0
    %v131 = vadd.f32 %v50, %v130
    %v132 = vpop.f32.mrb[0].mxu0
    %133 = vdwg.mxu0
    %v134 = vtanh.pop %v126
    %v135 = vtanh.pop %v131
    %v136 = vld [vmem:[%s4] sm:$0xff]
    %v137 = vld [vmem:[%s4 + $0x8] sm:$0xff]
    %v138 = vld [vmem:[%s4 + $0x10] sm:$0xff]
    %v139 = vld [vmem:[%s4 + $0x18] sm:$0xff]
    %v140 = vld [vmem:[%s5] sm:$0x1]
    %v142 = vlaneseq
    %v143 = vshrl.u32 %v142, 7
    %v144 = vsub.s32 0, %v143
    %v145 = vrot.slane %v140, %v144
    %vm147 = vcmask 261120
    %v149 = vsel %vm147, %v134, 0
    %v152 = vsel %vm147, %v135, 0
    %154 = vmatprep.subr.mxu0 0.0
    %155 = vmatpush1.msra.mxu0 %v136
    %156 = vmatprep.subr.mxu0 0.0
    %157 = vmatpush1.msra.mxu0 %v137
    %158 = vmatprep.subr.mxu0 0.0
    %159 = vmatpush1.msra.mxu0 %v138
    %160 = vmatprep.subr.mxu0 0.0
    %161 = vmatpush1.msra.mxu0 %v139
    %162 = vmatprep.subr.mxu0 0.0
    %163 = vmatpush1.msra.mxu0 0.0
    %164 = vmatprep.subr.mxu0 0.0
    %165 = vmatpush1.msra.mxu0 0.0
    %166 = vmatprep.subr.mxu0 0.0
    %167 = vmatpush1.msra.mxu0 0.0
    %168 = vmatprep.subr.mxu0 0.0
    %169 = vmatpush1.msra.mxu0 0.0
    %170 = vmatprep.subr.mxu0 0.0
    %171 = vmatpush1.msra.mxu0 0.0
    %172 = vmatprep.subr.mxu0 0.0
    %173 = vmatpush1.msra.mxu0 0.0
    %174 = vmatprep.subr.mxu0 0.0
    %175 = vmatpush1.msra.mxu0 0.0
    %176 = vmatprep.subr.mxu0 0.0
    %177 = vmatpush1.msra.mxu0 0.0
    %178 = vmatprep.subr.mxu0 0.0
    %179 = vmatpush1.msra.mxu0 0.0
    %180 = vmatprep.subr.mxu0 0.0
    %181 = vmatpush1.msra.mxu0 0.0
    %182 = vmatprep.subr.mxu0 0.0
    %183 = vmatpush1.msra.mxu0 0.0
    %184 = vmatprep.subr.mxu0 0.0
    %185 = vmatpush1.msra.mxu0 0.0
    %186 = vmatprep.subr.mxu0 0.0
    %187 = vmatpush1.msra.mxu0 0.0
    %188 = vmatprep.subr.mxu0 0.0
    %189 = vmatpush1.msra.mxu0 0.0
    %190 = vmatprep.subr.mxu0 0.0
    %191 = vmatpush1.msra.mxu0 0.0
    %192 = vmatprep.subr.mxu0 0.0
    %193 = vmatpush1.msra.mxu0 0.0
    %194 = vmatprep.subr.mxu0 0.0
    %195 = vmatpush1.msra.mxu0 0.0
    %196 = vmatprep.subr.mxu0 0.0
    %197 = vmatpush1.msra.mxu0 0.0
    %198 = vmatprep.subr.mxu0 0.0
    %199 = vmatpush1.msra.mxu0 0.0
    %200 = vmatprep.subr.mxu0 0.0
    %201 = vmatpush1.msra.mxu0 0.0
    %202 = vmatprep.subr.mxu0 0.0
    %203 = vmatpush1.msra.mxu0 0.0
    %204 = vmatprep.subr.mxu0 0.0
    %205 = vmatpush1.msra.mxu0 0.0
    %206 = vmatprep.subr.mxu0 0.0
    %207 = vmatpush1.msra.mxu0 0.0
    %208 = vmatprep.subr.mxu0 0.0
    %209 = vmatpush1.msra.mxu0 0.0
    %210 = vmatprep.subr.mxu0 0.0
    %211 = vmatpush1.msra.mxu0 0.0
    %212 = vmatprep.subr.mxu0 0.0
    %213 = vmatpush1.msra.mxu0 0.0
    %214 = vmatprep.subr.mxu0 0.0
    %215 = vmatpush1.msra.mxu0 0.0
    %216 = vmatprep.subr.mxu0 0.0
    %217 = vmatpush1.msra.mxu0 0.0
    %218 = vmatprep.mubr.f32.mxu0 0.0
    %219 = vmatmul.mubr.f32.gmra.mrb[0].mxu0 %v149
    %v220 = vpop.f32.mrb[0].mxu0
    %v221 = vadd.f32 %v145, %v220
    %v222 = vpop.f32.mrb[0].mxu0
    %223 = vmatprep.mubr.f32.mxu0 0.0
    %224 = vmatmul.mubr.f32.gmra.mrb[0].mxu0 %v152
    %v225 = vpop.f32.mrb[0].mxu0
    %v226 = vadd.f32 %v145, %v225
    %v227 = vpop.f32.mrb[0].mxu0
    %228 = vdwg.mxu0
    %v229 = vld [vmem:[%s6] sm:$0xff]
    %v230 = vld [vmem:[%s6 + $0x8] sm:$0xff]
    %v231 = vld [vmem:[%s6 + $0x10] sm:$0xff]
    %v232 = vld [vmem:[%s6 + $0x18] sm:$0xff]
    %v234 = vsel %vm147, 0.0, 0
    %236 = vmatprep.subr.mxu0 0.0
    %237 = vmatpush1.msra.mxu0 %v229
    %238 = vmatprep.subr.mxu0 0.0
    %239 = vmatpush1.msra.mxu0 %v230
    %240 = vmatprep.subr.mxu0 0.0
    %241 = vmatpush1.msra.mxu0 %v231
    %242 = vmatprep.subr.mxu0 0.0
    %243 = vmatpush1.msra.mxu0 %v232
    %244 = vmatprep.subr.mxu0 0.0
    %245 = vmatpush1.msra.mxu0 0.0
    %246 = vmatprep.subr.mxu0 0.0
    %247 = vmatpush1.msra.mxu0 0.0
    %248 = vmatprep.subr.mxu0 0.0
    %249 = vmatpush1.msra.mxu0 0.0
    %250 = vmatprep.subr.mxu0 0.0
    %251 = vmatpush1.msra.mxu0 0.0
    %252 = vmatprep.subr.mxu0 0.0
    %253 = vmatpush1.msra.mxu0 0.0
    %254 = vmatprep.subr.mxu0 0.0
    %255 = vmatpush1.msra.mxu0 0.0
    %256 = vmatprep.subr.mxu0 0.0
    %257 = vmatpush1.msra.mxu0 0.0
    %258 = vmatprep.subr.mxu0 0.0
    %259 = vmatpush1.msra.mxu0 0.0
    %260 = vmatprep.subr.mxu0 0.0
    %261 = vmatpush1.msra.mxu0 0.0
    %262 = vmatprep.subr.mxu0 0.0
    %263 = vmatpush1.msra.mxu0 0.0
    %264 = vmatprep.subr.mxu0 0.0
    %265 = vmatpush1.msra.mxu0 0.0
    %266 = vmatprep.subr.mxu0 0.0
    %267 = vmatpush1.msra.mxu0 0.0
    %268 = vmatprep.subr.mxu0 0.0
    %269 = vmatpush1.msra.mxu0 0.0
    %270 = vmatprep.subr.mxu0 0.0
    %271 = vmatpush1.msra.mxu0 0.0
    %272 = vmatprep.subr.mxu0 0.0
    %273 = vmatpush1.msra.mxu0 0.0
    %274 = vmatprep.subr.mxu0 0.0
    %275 = vmatpush1.msra.mxu0 0.0
    %276 = vmatprep.subr.mxu0 0.0
    %277 = vmatpush1.msra.mxu0 0.0
    %278 = vmatprep.subr.mxu0 0.0
    %279 = vmatpush1.msra.mxu0 0.0
    %280 = vmatprep.subr.mxu0 0.0
    %281 = vmatpush1.msra.mxu0 0.0
    %282 = vmatprep.subr.mxu0 0.0
    %283 = vmatpush1.msra.mxu0 0.0
    %284 = vmatprep.subr.mxu0 0.0
    %285 = vmatpush1.msra.mxu0 0.0
    %286 = vmatprep.subr.mxu0 0.0
    %287 = vmatpush1.msra.mxu0 0.0
    %288 = vmatprep.subr.mxu0 0.0
    %289 = vmatpush1.msra.mxu0 0.0
    %290 = vmatprep.subr.mxu0 0.0
    %291 = vmatpush1.msra.mxu0 0.0
    %292 = vmatprep.subr.mxu0 0.0
    %293 = vmatpush1.msra.mxu0 0.0
    %294 = vmatprep.subr.mxu0 0.0
    %295 = vmatpush1.msra.mxu0 0.0
    %296 = vmatprep.subr.mxu0 0.0
    %297 = vmatpush1.msra.mxu0 0.0
    %298 = vmatprep.subr.mxu0 0.0
    %299 = vmatpush1.msra.mxu0 0.0
    %300 = vmatprep.mubr.f32.mxu0 0.0
    %301 = vmatmul.mubr.f32.gmra.mrb[0].mxu0 %v234
    %v302 = vpop.f32.mrb[0].mxu0
    %v303 = vadd.f32 0.0, %v302
    %v304 = vpop.f32.mrb[0].mxu0
    %305 = vdwg.mxu0
    %v306 = vadd.f32 %v221, %v303
    %v307 = vxor.u32 %v306, 2147483648
    %v308 = vmul.f32 %v307, 1.442695
    %v309 = vpow.pop %v308
    %v310 = vadd.f32 %v309, 1.0
    %v311 = vrcp.pop %v310
    %v312 = vmul.f32 1.0, %v311
    %v313 = vtanh.pop %v306
    %v314 = vmul.f32 %v312, 0.0
    %316 = vrot.lane.b32.xlu0 %v313, 64
    %v317 = vpop.permute.xlu0 %316
    %v319 = vmul.f32 %v312, %v317
    %321 = vrot.lane.b32.xlu0 %v319, 32
    %v322 = vpop.permute.xlu0 %321
    %v324 = vadd.f32 %v314, %v322
    %v325 = vtanh.pop %v324
    %327 = vrot.lane.b32.xlu0 %v325, 64
    %v328 = vpop.permute.xlu0 %327
    %v330 = vmul.f32 %v312, %v328
    %332 = vrot.lane.b32.xlu0 %v330, 32
    %v333 = vpop.permute.xlu0 %332
    %vm335 = vcmask 254976
    %336 = vst.msk [vmem:[#allocation2] sm:$0x3] %vm335, %v333
    %v337 = vsel %vm147, %v333, 0
    %339 = vmatprep.subr.mxu0 0.0
    %340 = vmatpush1.msra.mxu0 %v229
    %341 = vmatprep.subr.mxu0 0.0
    %342 = vmatpush1.msra.mxu0 %v230
    %343 = vmatprep.subr.mxu0 0.0
    %344 = vmatpush1.msra.mxu0 %v231
    %345 = vmatprep.subr.mxu0 0.0
    %346 = vmatpush1.msra.mxu0 %v232
    %347 = vmatprep.subr.mxu0 0.0
    %348 = vmatpush1.msra.mxu0 0.0
    %349 = vmatprep.subr.mxu0 0.0
    %350 = vmatpush1.msra.mxu0 0.0
    %351 = vmatprep.subr.mxu0 0.0
    %352 = vmatpush1.msra.mxu0 0.0
    %353 = vmatprep.subr.mxu0 0.0
    %354 = vmatpush1.msra.mxu0 0.0
    %355 = vmatprep.subr.mxu0 0.0
    %356 = vmatpush1.msra.mxu0 0.0
    %357 = vmatprep.subr.mxu0 0.0
    %358 = vmatpush1.msra.mxu0 0.0
    %359 = vmatprep.subr.mxu0 0.0
    %360 = vmatpush1.msra.mxu0 0.0
    %361 = vmatprep.subr.mxu0 0.0
    %362 = vmatpush1.msra.mxu0 0.0
    %363 = vmatprep.subr.mxu0 0.0
    %364 = vmatpush1.msra.mxu0 0.0
    %365 = vmatprep.subr.mxu0 0.0
    %366 = vmatpush1.msra.mxu0 0.0
    %367 = vmatprep.subr.mxu0 0.0
    %368 = vmatpush1.msra.mxu0 0.0
    %369 = vmatprep.subr.mxu0 0.0
    %370 = vmatpush1.msra.mxu0 0.0
    %371 = vmatprep.subr.mxu0 0.0
    %372 = vmatpush1.msra.mxu0 0.0
    %373 = vmatprep.subr.mxu0 0.0
    %374 = vmatpush1.msra.mxu0 0.0
    %375 = vmatprep.subr.mxu0 0.0
    %376 = vmatpush1.msra.mxu0 0.0
    %377 = vmatprep.subr.mxu0 0.0
    %378 = vmatpush1.msra.mxu0 0.0
    %379 = vmatprep.subr.mxu0 0.0
    %380 = vmatpush1.msra.mxu0 0.0
    %381 = vmatprep.subr.mxu0 0.0
    %382 = vmatpush1.msra.mxu0 0.0
    %383 = vmatprep.subr.mxu0 0.0
    %384 = vmatpush1.msra.mxu0 0.0
    %385 = vmatprep.subr.mxu0 0.0
    %386 = vmatpush1.msra.mxu0 0.0
    %387 = vmatprep.subr.mxu0 0.0
    %388 = vmatpush1.msra.mxu0 0.0
    %389 = vmatprep.subr.mxu0 0.0
    %390 = vmatpush1.msra.mxu0 0.0
    %391 = vmatprep.subr.mxu0 0.0
    %392 = vmatpush1.msra.mxu0 0.0
    %393 = vmatprep.subr.mxu0 0.0
    %394 = vmatpush1.msra.mxu0 0.0
    %395 = vmatprep.subr.mxu0 0.0
    %396 = vmatpush1.msra.mxu0 0.0
    %397 = vmatprep.subr.mxu0 0.0
    %398 = vmatpush1.msra.mxu0 0.0
    %399 = vmatprep.subr.mxu0 0.0
    %400 = vmatpush1.msra.mxu0 0.0
    %401 = vmatprep.subr.mxu0 0.0
    %402 = vmatpush1.msra.mxu0 0.0
    %403 = vmatprep.mubr.f32.mxu0 0.0
    %404 = vmatmul.mubr.f32.gmra.mrb[0].mxu0 %v337
    %v405 = vpop.f32.mrb[0].mxu0
    %v406 = vadd.f32 0.0, %v405
    %v407 = vpop.f32.mrb[0].mxu0
    %408 = vdwg.mxu0
    %v410 = vrot.slane %v406, 6
    %v412 = vadd.f32 %v221, %v410
    %v413 = vxor.u32 %v412, 2147483648
    %v414 = vmul.f32 %v413, 1.442695
    %v415 = vpow.pop %v414
    %v416 = vadd.f32 %v415, 1.0
    %v417 = vrcp.pop %v416
    %v418 = vmul.f32 1.0, %v417
    %v419 = vtanh.pop %v412
    %v421 = vrot.slane %v324, 6
    %v423 = vmul.f32 %v418, %v421
    %425 = vrot.lane.b32.xlu0 %v419, 64
    %v426 = vpop.permute.xlu0 %425
    %v428 = vmul.f32 %v418, %v426
    %430 = vrot.lane.b32.xlu0 %v428, 32
    %v431 = vpop.permute.xlu0 %430
    %v433 = vadd.f32 %v423, %v431
    %v434 = vtanh.pop %v433
    %436 = vrot.lane.b32.xlu0 %v434, 64
    %v437 = vpop.permute.xlu0 %436
    %v439 = vmul.f32 %v418, %v437
    %441 = vrot.lane.b32.xlu0 %v439, 32
    %v442 = vpop.permute.xlu0 %441
    %vm444 = vcmask 257026
    %445 = vst.msk [vmem:[#allocation2] sm:$0xc] %vm444, %v442
    %v446 = vrot.slane %v439, 2
    %447 = vrot.lane.b32.xlu0 %v446, 32
    %v448 = vpop.permute.xlu0 %447
    %v449 = vsel %vm147, %v448, 0
    %451 = vmatprep.subr.mxu0 0.0
    %452 = vmatpush1.msra.mxu0 %v229
    %453 = vmatprep.subr.mxu0 0.0
    %454 = vmatpush1.msra.mxu0 %v230
    %455 = vmatprep.subr.mxu0 0.0
    %456 = vmatpush1.msra.mxu0 %v231
    %457 = vmatprep.subr.mxu0 0.0
    %458 = vmatpush1.msra.mxu0 %v232
    %459 = vmatprep.subr.mxu0 0.0
    %460 = vmatpush1.msra.mxu0 0.0
    %461 = vmatprep.subr.mxu0 0.0
    %462 = vmatpush1.msra.mxu0 0.0
    %463 = vmatprep.subr.mxu0 0.0
    %464 = vmatpush1.msra.mxu0 0.0
    %465 = vmatprep.subr.mxu0 0.0
    %466 = vmatpush1.msra.mxu0 0.0
    %467 = vmatprep.subr.mxu0 0.0
    %468 = vmatpush1.msra.mxu0 0.0
    %469 = vmatprep.subr.mxu0 0.0
    %470 = vmatpush1.msra.mxu0 0.0
    %471 = vmatprep.subr.mxu0 0.0
    %472 = vmatpush1.msra.mxu0 0.0
    %473 = vmatprep.subr.mxu0 0.0
    %474 = vmatpush1.msra.mxu0 0.0
    %475 = vmatprep.subr.mxu0 0.0
    %476 = vmatpush1.msra.mxu0 0.0
    %477 = vmatprep.subr.mxu0 0.0
    %478 = vmatpush1.msra.mxu0 0.0
    %479 = vmatprep.subr.mxu0 0.0
    %480 = vmatpush1.msra.mxu0 0.0
    %481 = vmatprep.subr.mxu0 0.0
    %482 = vmatpush1.msra.mxu0 0.0
    %483 = vmatprep.subr.mxu0 0.0
    %484 = vmatpush1.msra.mxu0 0.0
    %485 = vmatprep.subr.mxu0 0.0
    %486 = vmatpush1.msra.mxu0 0.0
    %487 = vmatprep.subr.mxu0 0.0
    %488 = vmatpush1.msra.mxu0 0.0
    %489 = vmatprep.subr.mxu0 0.0
    %490 = vmatpush1.msra.mxu0 0.0
    %491 = vmatprep.subr.mxu0 0.0
    %492 = vmatpush1.msra.mxu0 0.0
    %493 = vmatprep.subr.mxu0 0.0
    %494 = vmatpush1.msra.mxu0 0.0
    %495 = vmatprep.subr.mxu0 0.0
    %496 = vmatpush1.msra.mxu0 0.0
    %497 = vmatprep.subr.mxu0 0.0
    %498 = vmatpush1.msra.mxu0 0.0
    %499 = vmatprep.subr.mxu0 0.0
    %500 = vmatpush1.msra.mxu0 0.0
    %501 = vmatprep.subr.mxu0 0.0
    %502 = vmatpush1.msra.mxu0 0.0
    %503 = vmatprep.subr.mxu0 0.0
    %504 = vmatpush1.msra.mxu0 0.0
    %505 = vmatprep.subr.mxu0 0.0
    %506 = vmatpush1.msra.mxu0 0.0
    %507 = vmatprep.subr.mxu0 0.0
    %508 = vmatpush1.msra.mxu0 0.0
    %509 = vmatprep.subr.mxu0 0.0
    %510 = vmatpush1.msra.mxu0 0.0
    %511 = vmatprep.subr.mxu0 0.0
    %512 = vmatpush1.msra.mxu0 0.0
    %513 = vmatprep.subr.mxu0 0.0
    %514 = vmatpush1.msra.mxu0 0.0
    %515 = vmatprep.mubr.f32.mxu0 0.0
    %516 = vmatmul.mubr.f32.gmra.mrb[0].mxu0 %v449
    %v517 = vpop.f32.mrb[0].mxu0
    %v518 = vadd.f32 0.0, %v517
    %v519 = vpop.f32.mrb[0].mxu0
    %520 = vdwg.mxu0
    %v522 = vrot.slane %v518, 4
    %v524 = vadd.f32 %v221, %v522
    %v525 = vxor.u32 %v524, 2147483648
    %v526 = vmul.f32 %v525, 1.442695
    %v527 = vpow.pop %v526
    %v528 = vadd.f32 %v527, 1.0
    %v529 = vrcp.pop %v528
    %v530 = vmul.f32 1.0, %v529
    %v531 = vtanh.pop %v524
    %v533 = vrot.slane %v433, 6
    %v535 = vmul.f32 %v530, %v533
    %537 = vrot.lane.b32.xlu0 %v531, 64
    %v538 = vpop.permute.xlu0 %537
    %v540 = vmul.f32 %v530, %v538
    %542 = vrot.lane.b32.xlu0 %v540, 32
    %v543 = vpop.permute.xlu0 %542
    %v545 = vadd.f32 %v535, %v543
    %v546 = vtanh.pop %v545
    %548 = vrot.lane.b32.xlu0 %v546, 64
    %v549 = vpop.permute.xlu0 %548
    %v551 = vmul.f32 %v530, %v549
    %553 = vrot.lane.b32.xlu0 %v551, 32
    %v554 = vpop.permute.xlu0 %553
    %vm556 = vcmask 259076
    %557 = vst.msk [vmem:[#allocation2] sm:$0x30] %vm556, %v554
    %v558 = vrot.slane %v551, 4
    %559 = vrot.lane.b32.xlu0 %v558, 32
    %v560 = vpop.permute.xlu0 %559
    %v561 = vsel %vm147, %v560, 0
    %563 = vmatprep.subr.mxu0 0.0
    %564 = vmatpush1.msra.mxu0 %v229
    %565 = vmatprep.subr.mxu0 0.0
    %566 = vmatpush1.msra.mxu0 %v230
    %567 = vmatprep.subr.mxu0 0.0
    %568 = vmatpush1.msra.mxu0 %v231
    %569 = vmatprep.subr.mxu0 0.0
    %570 = vmatpush1.msra.mxu0 %v232
    %571 = vmatprep.subr.mxu0 0.0
    %572 = vmatpush1.msra.mxu0 0.0
    %573 = vmatprep.subr.mxu0 0.0
    %574 = vmatpush1.msra.mxu0 0.0
    %575 = vmatprep.subr.mxu0 0.0
    %576 = vmatpush1.msra.mxu0 0.0
    %577 = vmatprep.subr.mxu0 0.0
    %578 = vmatpush1.msra.mxu0 0.0
    %579 = vmatprep.subr.mxu0 0.0
    %580 = vmatpush1.msra.mxu0 0.0
    %581 = vmatprep.subr.mxu0 0.0
    %582 = vmatpush1.msra.mxu0 0.0
    %583 = vmatprep.subr.mxu0 0.0
    %584 = vmatpush1.msra.mxu0 0.0
    %585 = vmatprep.subr.mxu0 0.0
    %586 = vmatpush1.msra.mxu0 0.0
    %587 = vmatprep.subr.mxu0 0.0
    %588 = vmatpush1.msra.mxu0 0.0
    %589 = vmatprep.subr.mxu0 0.0
    %590 = vmatpush1.msra.mxu0 0.0
    %591 = vmatprep.subr.mxu0 0.0
    %592 = vmatpush1.msra.mxu0 0.0
    %593 = vmatprep.subr.mxu0 0.0
    %594 = vmatpush1.msra.mxu0 0.0
    %595 = vmatprep.subr.mxu0 0.0
    %596 = vmatpush1.msra.mxu0 0.0
    %597 = vmatprep.subr.mxu0 0.0
    %598 = vmatpush1.msra.mxu0 0.0
    %599 = vmatprep.subr.mxu0 0.0
    %600 = vmatpush1.msra.mxu0 0.0
    %601 = vmatprep.subr.mxu0 0.0
    %602 = vmatpush1.msra.mxu0 0.0
    %603 = vmatprep.subr.mxu0 0.0
    %604 = vmatpush1.msra.mxu0 0.0
    %605 = vmatprep.subr.mxu0 0.0
    %606 = vmatpush1.msra.mxu0 0.0
    %607 = vmatprep.subr.mxu0 0.0
    %608 = vmatpush1.msra.mxu0 0.0
    %609 = vmatprep.subr.mxu0 0.0
    %610 = vmatpush1.msra.mxu0 0.0
    %611 = vmatprep.subr.mxu0 0.0
    %612 = vmatpush1.msra.mxu0 0.0
    %613 = vmatprep.subr.mxu0 0.0
    %614 = vmatpush1.msra.mxu0 0.0
    %615 = vmatprep.subr.mxu0 0.0
    %616 = vmatpush1.msra.mxu0 0.0
    %617 = vmatprep.subr.mxu0 0.0
    %618 = vmatpush1.msra.mxu0 0.0
    %619 = vmatprep.subr.mxu0 0.0
    %620 = vmatpush1.msra.mxu0 0.0
    %621 = vmatprep.subr.mxu0 0.0
    %622 = vmatpush1.msra.mxu0 0.0
    %623 = vmatprep.subr.mxu0 0.0
    %624 = vmatpush1.msra.mxu0 0.0
    %625 = vmatprep.subr.mxu0 0.0
    %626 = vmatpush1.msra.mxu0 0.0
    %627 = vmatprep.mubr.f32.mxu0 0.0
    %628 = vmatmul.mubr.f32.gmra.mrb[0].mxu0 %v561
    %v629 = vpop.f32.mrb[0].mxu0
    %v630 = vadd.f32 0.0, %v629
    %v631 = vpop.f32.mrb[0].mxu0
    %632 = vdwg.mxu0
    %v634 = vrot.slane %v630, 2
    %v636 = vadd.f32 %v221, %v634
    %v637 = vxor.u32 %v636, 2147483648
    %v638 = vmul.f32 %v637, 1.442695
    %v639 = vpow.pop %v638
    %v640 = vadd.f32 %v639, 1.0
    %v641 = vrcp.pop %v640
    %v642 = vmul.f32 1.0, %v641
    %v643 = vtanh.pop %v636
    %v645 = vrot.slane %v545, 6
    %v647 = vmul.f32 %v642, %v645
    %649 = vrot.lane.b32.xlu0 %v643, 64
    %v650 = vpop.permute.xlu0 %649
    %v652 = vmul.f32 %v642, %v650
    %654 = vrot.lane.b32.xlu0 %v652, 32
    %v655 = vpop.permute.xlu0 %654
    %v657 = vadd.f32 %v647, %v655
    %v658 = vtanh.pop %v657
    %660 = vrot.lane.b32.xlu0 %v658, 64
    %v661 = vpop.permute.xlu0 %660
    %v663 = vmul.f32 %v642, %v661
    %665 = vrot.lane.b32.xlu0 %v663, 32
    %v666 = vpop.permute.xlu0 %665
    %vm668 = vcmask 261126
    %669 = vst.msk [vmem:[#allocation2] sm:$0xc0] %vm668, %v666
    %v670 = vrot.slane %v663, 6
    %671 = vrot.lane.b32.xlu0 %v670, 32
    %v672 = vpop.permute.xlu0 %671
    %v673 = vsel %vm147, %v672, 0
    %675 = vmatprep.subr.mxu0 0.0
    %676 = vmatpush1.msra.mxu0 %v229
    %677 = vmatprep.subr.mxu0 0.0
    %678 = vmatpush1.msra.mxu0 %v230
    %679 = vmatprep.subr.mxu0 0.0
    %680 = vmatpush1.msra.mxu0 %v231
    %681 = vmatprep.subr.mxu0 0.0
    %682 = vmatpush1.msra.mxu0 %v232
    %683 = vmatprep.subr.mxu0 0.0
    %684 = vmatpush1.msra.mxu0 0.0
    %685 = vmatprep.subr.mxu0 0.0
    %686 = vmatpush1.msra.mxu0 0.0
    %687 = vmatprep.subr.mxu0 0.0
    %688 = vmatpush1.msra.mxu0 0.0
    %689 = vmatprep.subr.mxu0 0.0
    %690 = vmatpush1.msra.mxu0 0.0
    %691 = vmatprep.subr.mxu0 0.0
    %692 = vmatpush1.msra.mxu0 0.0
    %693 = vmatprep.subr.mxu0 0.0
    %694 = vmatpush1.msra.mxu0 0.0
    %695 = vmatprep.subr.mxu0 0.0
    %696 = vmatpush1.msra.mxu0 0.0
    %697 = vmatprep.subr.mxu0 0.0
    %698 = vmatpush1.msra.mxu0 0.0
    %699 = vmatprep.subr.mxu0 0.0
    %700 = vmatpush1.msra.mxu0 0.0
    %701 = vmatprep.subr.mxu0 0.0
    %702 = vmatpush1.msra.mxu0 0.0
    %703 = vmatprep.subr.mxu0 0.0
    %704 = vmatpush1.msra.mxu0 0.0
    %705 = vmatprep.subr.mxu0 0.0
    %706 = vmatpush1.msra.mxu0 0.0
    %707 = vmatprep.subr.mxu0 0.0
    %708 = vmatpush1.msra.mxu0 0.0
    %709 = vmatprep.subr.mxu0 0.0
    %710 = vmatpush1.msra.mxu0 0.0
    %711 = vmatprep.subr.mxu0 0.0
    %712 = vmatpush1.msra.mxu0 0.0
    %713 = vmatprep.subr.mxu0 0.0
    %714 = vmatpush1.msra.mxu0 0.0
    %715 = vmatprep.subr.mxu0 0.0
    %716 = vmatpush1.msra.mxu0 0.0
    %717 = vmatprep.subr.mxu0 0.0
    %718 = vmatpush1.msra.mxu0 0.0
    %719 = vmatprep.subr.mxu0 0.0
    %720 = vmatpush1.msra.mxu0 0.0
    %721 = vmatprep.subr.mxu0 0.0
    %722 = vmatpush1.msra.mxu0 0.0
    %723 = vmatprep.subr.mxu0 0.0
    %724 = vmatpush1.msra.mxu0 0.0
    %725 = vmatprep.subr.mxu0 0.0
    %726 = vmatpush1.msra.mxu0 0.0
    %727 = vmatprep.subr.mxu0 0.0
    %728 = vmatpush1.msra.mxu0 0.0
    %729 = vmatprep.subr.mxu0 0.0
    %730 = vmatpush1.msra.mxu0 0.0
    %731 = vmatprep.subr.mxu0 0.0
    %732 = vmatpush1.msra.mxu0 0.0
    %733 = vmatprep.subr.mxu0 0.0
    %734 = vmatpush1.msra.mxu0 0.0
    %735 = vmatprep.subr.mxu0 0.0
    %736 = vmatpush1.msra.mxu0 0.0
    %737 = vmatprep.subr.mxu0 0.0
    %738 = vmatpush1.msra.mxu0 0.0
    %739 = vmatprep.mubr.f32.mxu0 0.0
    %740 = vmatmul.mubr.f32.gmra.mrb[0].mxu0 %v673
    %v741 = vpop.f32.mrb[0].mxu0
    %v742 = vadd.f32 0.0, %v741
    %v743 = vpop.f32.mrb[0].mxu0
    %744 = vdwg.mxu0
    %v745 = vadd.f32 %v226, %v742
    %v746 = vxor.u32 %v745, 2147483648
    %v747 = vmul.f32 %v746, 1.442695
    %v748 = vpow.pop %v747
    %v749 = vadd.f32 %v748, 1.0
    %v750 = vrcp.pop %v749
    %v751 = vmul.f32 1.0, %v750
    %v752 = vtanh.pop %v745
    %v754 = vrot.slane %v657, 6
    %v756 = vmul.f32 %v751, %v754
    %758 = vrot.lane.b32.xlu0 %v752, 64
    %v759 = vpop.permute.xlu0 %758
    %v761 = vmul.f32 %v751, %v759
    %763 = vrot.lane.b32.xlu0 %v761, 32
    %v764 = vpop.permute.xlu0 %763
    %v766 = vadd.f32 %v756, %v764
    %v767 = vtanh.pop %v766
    %769 = vrot.lane.b32.xlu0 %v767, 64
    %v770 = vpop.permute.xlu0 %769
    %v772 = vmul.f32 %v751, %v770
    %774 = vrot.lane.b32.xlu0 %v772, 32
    %v775 = vpop.permute.xlu0 %774
    %777 = vst.msk [vmem:[#allocation2 + $0x8] sm:$0x3] %vm335, %v775
    %v778 = vsel %vm147, %v775, 0
    %780 = vmatprep.subr.mxu0 0.0
    %781 = vmatpush1.msra.mxu0 %v229
    %782 = vmatprep.subr.mxu0 0.0
    %783 = vmatpush1.msra.mxu0 %v230
    %784 = vmatprep.subr.mxu0 0.0
    %785 = vmatpush1.msra.mxu0 %v231
    %786 = vmatprep.subr.mxu0 0.0
    %787 = vmatpush1.msra.mxu0 %v232
    %788 = vmatprep.subr.mxu0 0.0
    %789 = vmatpush1.msra.mxu0 0.0
    %790 = vmatprep.subr.mxu0 0.0
    %791 = vmatpush1.msra.mxu0 0.0
    %792 = vmatprep.subr.mxu0 0.0
    %793 = vmatpush1.msra.mxu0 0.0
    %794 = vmatprep.subr.mxu0 0.0
    %795 = vmatpush1.msra.mxu0 0.0
    %796 = vmatprep.subr.mxu0 0.0
    %797 = vmatpush1.msra.mxu0 0.0
    %798 = vmatprep.subr.mxu0 0.0
    %799 = vmatpush1.msra.mxu0 0.0
    %800 = vmatprep.subr.mxu0 0.0
    %801 = vmatpush1.msra.mxu0 0.0
    %802 = vmatprep.subr.mxu0 0.0
    %803 = vmatpush1.msra.mxu0 0.0
    %804 = vmatprep.subr.mxu0 0.0
    %805 = vmatpush1.msra.mxu0 0.0
    %806 = vmatprep.subr.mxu0 0.0
    %807 = vmatpush1.msra.mxu0 0.0
    %808 = vmatprep.subr.mxu0 0.0
    %809 = vmatpush1.msra.mxu0 0.0
    %810 = vmatprep.subr.mxu0 0.0
    %811 = vmatpush1.msra.mxu0 0.0
    %812 = vmatprep.subr.mxu0 0.0
    %813 = vmatpush1.msra.mxu0 0.0
    %814 = vmatprep.subr.mxu0 0.0
    %815 = vmatpush1.msra.mxu0 0.0
    %816 = vmatprep.subr.mxu0 0.0
    %817 = vmatpush1.msra.mxu0 0.0
    %818 = vmatprep.subr.mxu0 0.0
    %819 = vmatpush1.msra.mxu0 0.0
    %820 = vmatprep.subr.mxu0 0.0
    %821 = vmatpush1.msra.mxu0 0.0
    %822 = vmatprep.subr.mxu0 0.0
    %823 = vmatpush1.msra.mxu0 0.0
    %824 = vmatprep.subr.mxu0 0.0
    %825 = vmatpush1.msra.mxu0 0.0
    %826 = vmatprep.subr.mxu0 0.0
    %827 = vmatpush1.msra.mxu0 0.0
    %828 = vmatprep.subr.mxu0 0.0
    %829 = vmatpush1.msra.mxu0 0.0
    %830 = vmatprep.subr.mxu0 0.0
    %831 = vmatpush1.msra.mxu0 0.0
    %832 = vmatprep.subr.mxu0 0.0
    %833 = vmatpush1.msra.mxu0 0.0
    %834 = vmatprep.subr.mxu0 0.0
    %835 = vmatpush1.msra.mxu0 0.0
    %836 = vmatprep.subr.mxu0 0.0
    %837 = vmatpush1.msra.mxu0 0.0
    %838 = vmatprep.subr.mxu0 0.0
    %839 = vmatpush1.msra.mxu0 0.0
    %840 = vmatprep.subr.mxu0 0.0
    %841 = vmatpush1.msra.mxu0 0.0
    %842 = vmatprep.subr.mxu0 0.0
    %843 = vmatpush1.msra.mxu0 0.0
    %844 = vmatprep.mubr.f32.mxu0 0.0
    %845 = vmatmul.mubr.f32.gmra.mrb[0].mxu0 %v778
    %v846 = vpop.f32.mrb[0].mxu0
    %v847 = vadd.f32 0.0, %v846
    %v848 = vpop.f32.mrb[0].mxu0
    %849 = vdwg.mxu0
    %v851 = vrot.slane %v847, 6
    %v853 = vadd.f32 %v226, %v851
    %v854 = vxor.u32 %v853, 2147483648
    %v855 = vmul.f32 %v854, 1.442695
    %v856 = vpow.pop %v855
    %v857 = vadd.f32 %v856, 1.0
    %v858 = vrcp.pop %v857
    %v859 = vmul.f32 1.0, %v858
    %v860 = vtanh.pop %v853
    %v862 = vrot.slane %v766, 6
    %v864 = vmul.f32 %v859, %v862
    %866 = vrot.lane.b32.xlu0 %v860, 64
    %v867 = vpop.permute.xlu0 %866
    %v869 = vmul.f32 %v859, %v867
    %871 = vrot.lane.b32.xlu0 %v869, 32
    %v872 = vpop.permute.xlu0 %871
    %v874 = vadd.f32 %v864, %v872
    %v875 = vtanh.pop %v874
    %877 = vrot.lane.b32.xlu0 %v875, 64
    %v878 = vpop.permute.xlu0 %877
    %v880 = vmul.f32 %v859, %v878
    %882 = vrot.lane.b32.xlu0 %v880, 32
    %v883 = vpop.permute.xlu0 %882
    %885 = vst.msk [vmem:[#allocation2 + $0x8] sm:$0xc] %vm444, %v883
    %v886 = vrot.slane %v880, 2
    %887 = vrot.lane.b32.xlu0 %v886, 32
    %v888 = vpop.permute.xlu0 %887
    %v889 = vsel %vm147, %v888, 0
    %891 = vmatprep.subr.mxu0 0.0
    %892 = vmatpush1.msra.mxu0 %v229
    %893 = vmatprep.subr.mxu0 0.0
    %894 = vmatpush1.msra.mxu0 %v230
    %895 = vmatprep.subr.mxu0 0.0
    %896 = vmatpush1.msra.mxu0 %v231
    %897 = vmatprep.subr.mxu0 0.0
    %898 = vmatpush1.msra.mxu0 %v232
    %899 = vmatprep.subr.mxu0 0.0
    %900 = vmatpush1.msra.mxu0 0.0
    %901 = vmatprep.subr.mxu0 0.0
    %902 = vmatpush1.msra.mxu0 0.0
    %903 = vmatprep.subr.mxu0 0.0
    %904 = vmatpush1.msra.mxu0 0.0
    %905 = vmatprep.subr.mxu0 0.0
    %906 = vmatpush1.msra.mxu0 0.0
    %907 = vmatprep.subr.mxu0 0.0
    %908 = vmatpush1.msra.mxu0 0.0
    %909 = vmatprep.subr.mxu0 0.0
    %910 = vmatpush1.msra.mxu0 0.0
    %911 = vmatprep.subr.mxu0 0.0
    %912 = vmatpush1.msra.mxu0 0.0
    %913 = vmatprep.subr.mxu0 0.0
    %914 = vmatpush1.msra.mxu0 0.0
    %915 = vmatprep.subr.mxu0 0.0
    %916 = vmatpush1.msra.mxu0 0.0
    %917 = vmatprep.subr.mxu0 0.0
    %918 = vmatpush1.msra.mxu0 0.0
    %919 = vmatprep.subr.mxu0 0.0
    %920 = vmatpush1.msra.mxu0 0.0
    %921 = vmatprep.subr.mxu0 0.0
    %922 = vmatpush1.msra.mxu0 0.0
    %923 = vmatprep.subr.mxu0 0.0
    %924 = vmatpush1.msra.mxu0 0.0
    %925 = vmatprep.subr.mxu0 0.0
    %926 = vmatpush1.msra.mxu0 0.0
    %927 = vmatprep.subr.mxu0 0.0
    %928 = vmatpush1.msra.mxu0 0.0
    %929 = vmatprep.subr.mxu0 0.0
    %930 = vmatpush1.msra.mxu0 0.0
    %931 = vmatprep.subr.mxu0 0.0
    %932 = vmatpush1.msra.mxu0 0.0
    %933 = vmatprep.subr.mxu0 0.0
    %934 = vmatpush1.msra.mxu0 0.0
    %935 = vmatprep.subr.mxu0 0.0
    %936 = vmatpush1.msra.mxu0 0.0
    %937 = vmatprep.subr.mxu0 0.0
    %938 = vmatpush1.msra.mxu0 0.0
    %939 = vmatprep.subr.mxu0 0.0
    %940 = vmatpush1.msra.mxu0 0.0
    %941 = vmatprep.subr.mxu0 0.0
    %942 = vmatpush1.msra.mxu0 0.0
    %943 = vmatprep.subr.mxu0 0.0
    %944 = vmatpush1.msra.mxu0 0.0
    %945 = vmatprep.subr.mxu0 0.0
    %946 = vmatpush1.msra.mxu0 0.0
    %947 = vmatprep.subr.mxu0 0.0
    %948 = vmatpush1.msra.mxu0 0.0
    %949 = vmatprep.subr.mxu0 0.0
    %950 = vmatpush1.msra.mxu0 0.0
    %951 = vmatprep.subr.mxu0 0.0
    %952 = vmatpush1.msra.mxu0 0.0
    %953 = vmatprep.subr.mxu0 0.0
    %954 = vmatpush1.msra.mxu0 0.0
    %955 = vmatprep.mubr.f32.mxu0 0.0
    %956 = vmatmul.mubr.f32.gmra.mrb[0].mxu0 %v889
    %v957 = vpop.f32.mrb[0].mxu0
    %v958 = vadd.f32 0.0, %v957
    %v959 = vpop.f32.mrb[0].mxu0
    %960 = vdwg.mxu0
    %v962 = vrot.slane %v958, 4
    %v964 = vadd.f32 %v226, %v962
    %v965 = vxor.u32 %v964, 2147483648
    %v966 = vmul.f32 %v965, 1.442695
    %v967 = vpow.pop %v966
    %v968 = vadd.f32 %v967, 1.0
    %v969 = vrcp.pop %v968
    %v970 = vmul.f32 1.0, %v969
    %v971 = vtanh.pop %v964
    %v973 = vrot.slane %v874, 6
    %v975 = vmul.f32 %v970, %v973
    %977 = vrot.lane.b32.xlu0 %v971, 64
    %v978 = vpop.permute.xlu0 %977
    %v980 = vmul.f32 %v970, %v978
    %982 = vrot.lane.b32.xlu0 %v980, 32
    %v983 = vpop.permute.xlu0 %982
    %v985 = vadd.f32 %v975, %v983
    %v986 = vtanh.pop %v985
    %988 = vrot.lane.b32.xlu0 %v986, 64
    %v989 = vpop.permute.xlu0 %988
    %v991 = vmul.f32 %v970, %v989
    %993 = vrot.lane.b32.xlu0 %v991, 32
    %v994 = vpop.permute.xlu0 %993
    %996 = vst.msk [vmem:[#allocation2 + $0x8] sm:$0x30] %vm556, %v994
    %v997 = vrot.slane %v991, 4
    %998 = vrot.lane.b32.xlu0 %v997, 32
    %v999 = vpop.permute.xlu0 %998
    %v1000 = vsel %vm147, %v999, 0
    %1002 = vmatprep.subr.mxu0 0.0
    %1003 = vmatpush1.msra.mxu0 %v229
    %1004 = vmatprep.subr.mxu0 0.0
    %1005 = vmatpush1.msra.mxu0 %v230
    %1006 = vmatprep.subr.mxu0 0.0
    %1007 = vmatpush1.msra.mxu0 %v231
    %1008 = vmatprep.subr.mxu0 0.0
    %1009 = vmatpush1.msra.mxu0 %v232
    %1010 = vmatprep.subr.mxu0 0.0
    %1011 = vmatpush1.msra.mxu0 0.0
    %1012 = vmatprep.subr.mxu0 0.0
    %1013 = vmatpush1.msra.mxu0 0.0
    %1014 = vmatprep.subr.mxu0 0.0
    %1015 = vmatpush1.msra.mxu0 0.0
    %1016 = vmatprep.subr.mxu0 0.0
    %1017 = vmatpush1.msra.mxu0 0.0
    %1018 = vmatprep.subr.mxu0 0.0
    %1019 = vmatpush1.msra.mxu0 0.0
    %1020 = vmatprep.subr.mxu0 0.0
    %1021 = vmatpush1.msra.mxu0 0.0
    %1022 = vmatprep.subr.mxu0 0.0
    %1023 = vmatpush1.msra.mxu0 0.0
    %1024 = vmatprep.subr.mxu0 0.0
    %1025 = vmatpush1.msra.mxu0 0.0
    %1026 = vmatprep.subr.mxu0 0.0
    %1027 = vmatpush1.msra.mxu0 0.0
    %1028 = vmatprep.subr.mxu0 0.0
    %1029 = vmatpush1.msra.mxu0 0.0
    %1030 = vmatprep.subr.mxu0 0.0
    %1031 = vmatpush1.msra.mxu0 0.0
    %1032 = vmatprep.subr.mxu0 0.0
    %1033 = vmatpush1.msra.mxu0 0.0
    %1034 = vmatprep.subr.mxu0 0.0
    %1035 = vmatpush1.msra.mxu0 0.0
    %1036 = vmatprep.subr.mxu0 0.0
    %1037 = vmatpush1.msra.mxu0 0.0
    %1038 = vmatprep.subr.mxu0 0.0
    %1039 = vmatpush1.msra.mxu0 0.0
    %1040 = vmatprep.subr.mxu0 0.0
    %1041 = vmatpush1.msra.mxu0 0.0
    %1042 = vmatprep.subr.mxu0 0.0
    %1043 = vmatpush1.msra.mxu0 0.0
    %1044 = vmatprep.subr.mxu0 0.0
    %1045 = vmatpush1.msra.mxu0 0.0
    %1046 = vmatprep.subr.mxu0 0.0
    %1047 = vmatpush1.msra.mxu0 0.0
    %1048 = vmatprep.subr.mxu0 0.0
    %1049 = vmatpush1.msra.mxu0 0.0
    %1050 = vmatprep.subr.mxu0 0.0
    %1051 = vmatpush1.msra.mxu0 0.0
    %1052 = vmatprep.subr.mxu0 0.0
    %1053 = vmatpush1.msra.mxu0 0.0
    %1054 = vmatprep.subr.mxu0 0.0
    %1055 = vmatpush1.msra.mxu0 0.0
    %1056 = vmatprep.subr.mxu0 0.0
    %1057 = vmatpush1.msra.mxu0 0.0
    %1058 = vmatprep.subr.mxu0 0.0
    %1059 = vmatpush1.msra.mxu0 0.0
    %1060 = vmatprep.subr.mxu0 0.0
    %1061 = vmatpush1.msra.mxu0 0.0
    %1062 = vmatprep.subr.mxu0 0.0
    %1063 = vmatpush1.msra.mxu0 0.0
    %1064 = vmatprep.subr.mxu0 0.0
    %1065 = vmatpush1.msra.mxu0 0.0
    %1066 = vmatprep.mubr.f32.mxu0 0.0
    %1067 = vmatmul.mubr.f32.gmra.mrb[0].mxu0 %v1000
    %v1068 = vpop.f32.mrb[0].mxu0
    %v1069 = vadd.f32 0.0, %v1068
    %v1070 = vpop.f32.mrb[0].mxu0
    %1071 = vdwg.mxu0
    %v1073 = vrot.slane %v1069, 2
    %v1075 = vadd.f32 %v226, %v1073
    %v1076 = vxor.u32 %v1075, 2147483648
    %v1077 = vmul.f32 %v1076, 1.442695
    %v1078 = vpow.pop %v1077
    %v1079 = vadd.f32 %v1078, 1.0
    %v1080 = vrcp.pop %v1079
    %v1081 = vmul.f32 1.0, %v1080
    %v1082 = vtanh.pop %v1075
    %v1084 = vrot.slane %v985, 6
    %v1086 = vmul.f32 %v1081, %v1084
    %1088 = vrot.lane.b32.xlu0 %v1082, 64
    %v1089 = vpop.permute.xlu0 %1088
    %v1091 = vmul.f32 %v1081, %v1089
    %1093 = vrot.lane.b32.xlu0 %v1091, 32
    %v1094 = vpop.permute.xlu0 %1093
    %v1096 = vadd.f32 %v1086, %v1094
    %v1097 = vtanh.pop %v1096
    %1099 = vrot.lane.b32.xlu0 %v1097, 64
    %v1100 = vpop.permute.xlu0 %1099
    %v1102 = vmul.f32 %v1081, %v1100
    %1104 = vrot.lane.b32.xlu0 %v1102, 32
    %v1105 = vpop.permute.xlu0 %1104
    %1107 = vst.msk [vmem:[#allocation2 + $0x8] sm:$0xc0] %vm668, %v1105
    %v1108 = vld [vmem:[#allocation2] sm:$0xff]
    %v1109 = vld [vmem:[#allocation2 + $0x8] sm:$0xff]
    %v1110 = vld [vmem:[%s7] sm:$0xff]
    %v1111 = vld [vmem:[%s7 + $0x8] sm:$0xff]
    %v1112 = vld [vmem:[%s7 + $0x10] sm:$0xff]
    %v1113 = vld [vmem:[%s7 + $0x18] sm:$0xff]
    %v1114 = vld [vmem:[#allocation3] sm:$0x1]
    %v1116 = vlaneseq
    %v1117 = vshrl.u32 %v1116, 7
    %v1118 = vsub.s32 0, %v1117
    %v1119 = vrot.slane %v1114, %v1118
    %v1122 = vsel %vm147, %v1108, 0
    %v1125 = vsel %vm147, %v1109, 0
    %1127 = vmatprep.subr.mxu0 0.0
    %1128 = vmatpush1.msra.mxu0 %v1110
    %1129 = vmatprep.subr.mxu0 0.0
    %1130 = vmatpush1.msra.mxu0 %v1111
    %1131 = vmatprep.subr.mxu0 0.0
    %1132 = vmatpush1.msra.mxu0 %v1112
    %1133 = vmatprep.subr.mxu0 0.0
    %1134 = vmatpush1.msra.mxu0 %v1113
    %1135 = vmatprep.subr.mxu0 0.0
    %1136 = vmatpush1.msra.mxu0 0.0
    %1137 = vmatprep.subr.mxu0 0.0
    %1138 = vmatpush1.msra.mxu0 0.0
    %1139 = vmatprep.subr.mxu0 0.0
    %1140 = vmatpush1.msra.mxu0 0.0
    %1141 = vmatprep.subr.mxu0 0.0
    %1142 = vmatpush1.msra.mxu0 0.0
    %1143 = vmatprep.subr.mxu0 0.0
    %1144 = vmatpush1.msra.mxu0 0.0
    %1145 = vmatprep.subr.mxu0 0.0
    %1146 = vmatpush1.msra.mxu0 0.0
    %1147 = vmatprep.subr.mxu0 0.0
    %1148 = vmatpush1.msra.mxu0 0.0
    %1149 = vmatprep.subr.mxu0 0.0
    %1150 = vmatpush1.msra.mxu0 0.0
    %1151 = vmatprep.subr.mxu0 0.0
    %1152 = vmatpush1.msra.mxu0 0.0
    %1153 = vmatprep.subr.mxu0 0.0
    %1154 = vmatpush1.msra.mxu0 0.0
    %1155 = vmatprep.subr.mxu0 0.0
    %1156 = vmatpush1.msra.mxu0 0.0
    %1157 = vmatprep.subr.mxu0 0.0
    %1158 = vmatpush1.msra.mxu0 0.0
    %1159 = vmatprep.subr.mxu0 0.0
    %1160 = vmatpush1.msra.mxu0 0.0
    %1161 = vmatprep.subr.mxu0 0.0
    %1162 = vmatpush1.msra.mxu0 0.0
    %1163 = vmatprep.subr.mxu0 0.0
    %1164 = vmatpush1.msra.mxu0 0.0
    %1165 = vmatprep.subr.mxu0 0.0
    %1166 = vmatpush1.msra.mxu0 0.0
    %1167 = vmatprep.subr.mxu0 0.0
    %1168 = vmatpush1.msra.mxu0 0.0
    %1169 = vmatprep.subr.mxu0 0.0
    %1170 = vmatpush1.msra.mxu0 0.0
    %1171 = vmatprep.subr.mxu0 0.0
    %1172 = vmatpush1.msra.mxu0 0.0
    %1173 = vmatprep.subr.mxu0 0.0
    %1174 = vmatpush1.msra.mxu0 0.0
    %1175 = vmatprep.subr.mxu0 0.0
    %1176 = vmatpush1.msra.mxu0 0.0
    %1177 = vmatprep.subr.mxu0 0.0
    %1178 = vmatpush1.msra.mxu0 0.0
    %1179 = vmatprep.subr.mxu0 0.0
    %1180 = vmatpush1.msra.mxu0 0.0
    %1181 = vmatprep.subr.mxu0 0.0
    %1182 = vmatpush1.msra.mxu0 0.0
    %1183 = vmatprep.subr.mxu0 0.0
    %1184 = vmatpush1.msra.mxu0 0.0
    %1185 = vmatprep.subr.mxu0 0.0
    %1186 = vmatpush1.msra.mxu0 0.0
    %1187 = vmatprep.subr.mxu0 0.0
    %1188 = vmatpush1.msra.mxu0 0.0
    %1189 = vmatprep.subr.mxu0 0.0
    %1190 = vmatpush1.msra.mxu0 0.0
    %1191 = vmatprep.mubr.f32.mxu0 0.0
    %1192 = vmatmul.mubr.f32.gmra.mrb[0].mxu0 %v1122
    %v1193 = vpop.f32.mrb[0].mxu0
    %v1194 = vadd.f32 %v1119, %v1193
    %v1195 = vpop.f32.mrb[0].mxu0
    %1196 = vmatprep.mubr.f32.mxu0 0.0
    %1197 = vmatmul.mubr.f32.gmra.mrb[0].mxu0 %v1125
    %v1198 = vpop.f32.mrb[0].mxu0
    %v1199 = vadd.f32 %v1119, %v1198
    %v1200 = vpop.f32.mrb[0].mxu0
    %1201 = vdwg.mxu0
    %v1202 = vld [vmem:[%s1] sm:$0xff]
    %v1203 = vld [vmem:[%s1 + $0x8] sm:$0xff]
    %v1204 = vmax.f32 %v1194, 0.0
    %v1205 = vmax.f32 %v1199, 0.0
    %v1206 = vmul.f32 %v1194, %v1202
    %v1207 = vmul.f32 %v1199, %v1203
    %v1208 = vsub.f32 %v1204, %v1206
    %v1209 = vsub.f32 %v1205, %v1207
    %v1210 = vand.u32 2147483647, %v1194
    %v1211 = vand.u32 2147483647, %v1199
    %v1212 = vsub.f32 0.0, %v1210
    %v1213 = vsub.f32 0.0, %v1211
    %v1214 = vmul.f32 %v1212, 1.442695
    %v1215 = vpow.pop %v1214
    %v1216 = vmul.f32 %v1213, 1.442695
    %v1217 = vpow.pop %v1216
    %v1218 = vadd.f32 %v1215, 1.0
    %v1219 = vadd.f32 %v1217, 1.0
    %v1220 = vlog2.pop %v1218
    %v1221 = vmul.f32 %v1220, 0.6931472
    %v1222 = vlog2.pop %v1219
    %v1223 = vmul.f32 %v1222, 0.6931472
    %v1224 = vadd.f32 %v1208, %v1221
    %v1225 = vadd.f32 %v1209, %v1223
    %1228 = vrot.lane.b32.xlu0 %v1202, 127
    %v1229 = vpop.permute.xlu0 %1228
    %1230 = vrot.lane.b32.xlu0 %v1203, 127
    %v1231 = vpop.permute.xlu0 %1230
    %v1234 = vmul.f32 %v1224, %v1229
    %v1235 = vmul.f32 %v1225, %v1231
    %vm1236 = vcmask 7168
    %v1237 = vsel %vm1236, %v1234, 0.0
    %v1238 = vsel %vm1236, %v1235, 0.0
    %v1239 = vadd.f32 %v1237, %v1238
    %1240 = vadd.xlane.f32.xlu0 %v1239
    %v1241 = vpop.xlane.xlu0 %1240
    %v1242 = vrot.slane %v1241, 4
    %v1243 = vadd.f32 %v1241, %v1242
    %v1244 = vrot.slane %v1243, 2
    %v1245 = vadd.f32 %v1243, %v1244
    %v1246 = vrot.slane %v1245, 1
    %v1247 = vadd.f32 %v1245, %v1246
    %s1248 = vtos %v1247
    %v1249 = vstv %s1248
    %vm1250 = vcmask 0
    %1251 = vst.msk [vmem:[#allocation4] sm:$0x1] %vm1250, %v1249
    // Predicated region
    $region38: #{baseline_system_forward.1} parent=1 // pred_check
      _
    $region39: #{baseline_system_forward.1} parent=1 // pred_check_branch
      %1253 = sbr.rel (0) target = $region41
    $region40: #{baseline_system_forward.1} parent=1 // pred_region
      %s1255 = ssub.s32 16, 16
      %1256 = vsyncadd [#allocation5], %s1255
      %s1258 = sshll.u32 [#allocation4], 4
      %s1259 = int_to_ptr.vmem [resolvable:$true] %s1258
      %1261 = dma.vmem_to_hbm [thread:$0]  %s1259, 16, %s9, [#allocation5]
    $region41: #{baseline_system_forward.1} parent=1 // pred_fallthru
      _
    // Predicated region
    $region42: #{baseline_system_forward.1} parent=1 // pred_check
      _
    $region43: #{baseline_system_forward.1} parent=1 // pred_check_branch
      %1263 = sbr.rel (0) target = $region45
    $region44: #{baseline_system_forward.1} parent=1 // pred_region
      %1264 = dma.done [#allocation5], 16
    $region45: #{baseline_system_forward.1} parent=1 // pred_fallthru
      _
    %1265 = vsyncpa [#allocation5], 1

</llo_original>
